<compile_context>
chip_gen: v6e
topology: v6e:2x2x1
jax: 0.10.0
libtpu: 0.0.40
codegen_flags: <defaults>
</compile_context>

<pallas_src>
import functools

import jax
import jax.numpy as jnp
from jax.experimental import pallas as pl
from jax.experimental.pallas import tpu as pltpu


# ----------------------------------------------------------------------------
# Fused Pallas kernel: Downsample1d + num_layers x (GN->SiLU->Conv3) x 2 + residual
# ----------------------------------------------------------------------------
def down_block_kernel(xr_ref, dsw_ref, dsb_ref, gavg_ref,
                      g1_ref, be1_ref, w1_ref, cb1_ref,
                      g2_ref, be2_ref, w2_ref, cb2_ref,
                      o_ref, ybuf, *, eps, num_taps, num_layers):
    C = o_ref.shape[1]
    Lout = o_ref.shape[2]

    # ---- Downsample1d: strided conv as ONE MXU matmul over phase-split taps.
    # xr_ref[0] is (factor*Cin, S); tap q is the contiguous window [q, q+Lout).
    taps = [xr_ref[0, :, q:q + Lout] for q in range(num_taps)]
    patch = jnp.concatenate(taps, axis=0)                      # (T*F*Cin, Lout)
    x = jnp.dot(dsw_ref[...], patch,
                preferred_element_type=jnp.float32) + dsb_ref[...]   # (C, Lout)

    # Zero the halo scratch once; columns 0 and Lout+1 stay zero forever.
    ybuf[...] = jnp.zeros_like(ybuf)

    gavg = gavg_ref[...]                                       # (C, C) group-mean matrix

    def gn_silu_conv3(h, gamma, beta, w, bias):
        # --- GroupNorm (one pass: sum & sum of squares, biased variance) ----
        s1 = jnp.sum(h, axis=1, keepdims=True)                 # (C, 1)
        s2 = jnp.sum(h * h, axis=1, keepdims=True)             # (C, 1)
        mean = jnp.dot(gavg, s1, preferred_element_type=jnp.float32)   # per-channel group mean
        ex2 = jnp.dot(gavg, s2, preferred_element_type=jnp.float32)
        rstd = jax.lax.rsqrt(ex2 - mean * mean + eps)
        scale = gamma * rstd                                   # fold affine into scale/shift
        shift = beta - mean * scale
        y = h * scale + shift
        # --- SiLU -----------------------------------------------------------
        y = y * jax.nn.sigmoid(y)
        # --- 3-tap conv (pad=1) with the halo handled in VMEM ----------------
        ybuf[:, 1:Lout + 1] = y                                # interior; edges stay 0
        stacked = jnp.concatenate(
            [ybuf[:, 0:Lout],          # tap k=0 : y[l-1] (zero at l=0)
             y,                        # tap k=1 : y[l]
             ybuf[:, 2:Lout + 2]],     # tap k=2 : y[l+1] (zero at l=Lout-1)
            axis=0)                                            # (3C, Lout)
        return jnp.dot(w, stacked,
                       preferred_element_type=jnp.float32) + bias

    for layer in range(num_layers):
        h = gn_silu_conv3(x, g1_ref[layer], be1_ref[layer],
                          w1_ref[layer], cb1_ref[layer])
        h = gn_silu_conv3(h, g2_ref[layer], be2_ref[layer],
                          w2_ref[layer], cb2_ref[layer])
        x = h + x                                              # to_out = Identity

    o_ref[0] = x.astype(o_ref.dtype)


# ----------------------------------------------------------------------------
# Wrapper: parameter re-layout (tiny, one-time) + one pallas_call
# ----------------------------------------------------------------------------
def downsample_block_1d(x, params, *, factor, num_groups, kernel_multiplier=2,
                        eps=1e-5):
    B, Cin, L = x.shape
    ds_w, ds_b = params["ds_w"], params["ds_b"]
    Cout = ds_w.shape[0]
    assert Cout % num_groups == 0, "channels must be divisible by num_groups"
    assert kernel_multiplier % 2 == 0, "Kernel multiplier must be even"

    K = factor * kernel_multiplier + 1                 # downsample kernel size
    P = factor * (kernel_multiplier // 2)              # downsample padding
    Lout = (L + 2 * P - K) // factor + 1
    T = kernel_multiplier + 1                          # taps after phase split
    S = Lout + kernel_multiplier                       # phase-split length
    Lp = factor * S                                    # padded input length (>= L + 2P)
    FCin = factor * Cin

    # --- glue (1x data, once per call): phase-split input so the strided conv
    #     becomes contiguous static slices + one matmul in VMEM.
    #     xr[b, r*Cin + ci, s] = xpad[b, ci, s*factor + r]
    xp = jnp.pad(x, ((0, 0), (0, 0), (P, Lp - L - P)))
    xr = (xp.reshape(B, Cin, S, factor)
            .transpose(0, 3, 1, 2)
            .reshape(B, FCin, S))

    # downsample weight -> (Cout, T*F*Cin); column index = q*(F*Cin) + r*Cin + ci
    w_pad = jnp.pad(ds_w, ((0, 0), (0, 0), (0, T * factor - K)))
    w_ds = (w_pad.reshape(Cout, Cin, T, factor)
                 .transpose(0, 2, 3, 1)
                 .reshape(Cout, T * FCin))
    b_ds = ds_b.reshape(Cout, 1)

    # block-diagonal group-averaging matrix for GroupNorm stats
    cpg = Cout // num_groups
    gavg = (jnp.kron(jnp.eye(num_groups, dtype=jnp.float32),
                     jnp.ones((cpg, cpg), jnp.float32))
            * jnp.float32(1.0 / (cpg * Lout)))                 # (Cout, Cout)

    # stack per-layer ResNet params along a leading "layer" axis
    blocks = params["blocks"]
    NL = len(blocks)

    def stack_vec(key):
        return jnp.stack([blk[key] for blk in blocks]).reshape(NL, Cout, 1)

    g1, be1 = stack_vec("gn1_g"), stack_vec("gn1_b")
    g2, be2 = stack_vec("gn2_g"), stack_vec("gn2_b")
    cb1, cb2 = stack_vec("c1_b"), stack_vec("c2_b")
    # conv weight (Cout, Cin, 3) -> (Cout, 3*Cin) with column index = k*Cin + ci
    w1 = jnp.stack([blk["c1_w"].transpose(0, 2, 1).reshape(Cout, 3 * Cout)
                    for blk in blocks])
    w2 = jnp.stack([blk["c2_w"].transpose(0, 2, 1).reshape(Cout, 3 * Cout)
                    for blk in blocks])

    def rep(shape):
        nd = len(shape)
        return pl.BlockSpec(shape, lambda b, _nd=nd: (0,) * _nd)

    kern = functools.partial(down_block_kernel, eps=eps, num_taps=T,
                             num_layers=NL)

    return pl.pallas_call(
        kern,
        out_shape=jax.ShapeDtypeStruct((B, Cout, Lout), x.dtype),
        grid=(B,),
        in_specs=[
            pl.BlockSpec((1, FCin, S), lambda b: (b, 0, 0)),   # phase-split input
            rep((Cout, T * FCin)),                             # downsample weight
            rep((Cout, 1)),                                    # downsample bias
            rep((Cout, Cout)),                                 # group-avg matrix
            rep((NL, Cout, 1)), rep((NL, Cout, 1)),            # gn1 gamma / beta
            rep((NL, Cout, 3 * Cout)), rep((NL, Cout, 1)),     # conv1 w / b
            rep((NL, Cout, 1)), rep((NL, Cout, 1)),            # gn2 gamma / beta
            rep((NL, Cout, 3 * Cout)), rep((NL, Cout, 1)),     # conv2 w / b
        ],
        out_specs=pl.BlockSpec((1, Cout, Lout), lambda b: (b, 0, 0)),
        scratch_shapes=[pltpu.VMEM((Cout, Lout + 2), jnp.float32)],
        compiler_params=pltpu.CompilerParams(
            dimension_semantics=("parallel",)),
    )(xr, w_ds, b_ds, gavg, g1, be1, w1, cb1, g2, be2, w2, cb2)


# ----------------------------------------------------------------------------
# Pure-JAX reference (for correctness check)
# ----------------------------------------------------------------------------
def _ref_forward(x, params, *, factor, num_groups, kernel_multiplier=2, eps=1e-5):
    def conv1d(x, w, b, stride, pad):
        y = jax.lax.conv_general_dilated(
            x, w, window_strides=(stride,), padding=[(pad, pad)],
            dimension_numbers=("NCH", "OIH", "NCH"))
        return y + b[None, :, None]

    def gn(x, g, b):
        B, C, L = x.shape
        G = num_groups
        xg = x.reshape(B, G, C // G, L)
        m = xg.mean(axis=(2, 3), keepdims=True)
        v = ((xg - m) ** 2).mean(axis=(2, 3), keepdims=True)
        xn = ((xg - m) * jax.lax.rsqrt(v + eps)).reshape(B, C, L)
        return xn * g[None, :, None] + b[None, :, None]

    def silu(x):
        return x * jax.nn.sigmoid(x)

    pad = factor * (kernel_multiplier // 2)
    x = conv1d(x, params["ds_w"], params["ds_b"], factor, pad)
    for blk in params["blocks"]:
        h = conv1d(silu(gn(x, blk["gn1_g"], blk["gn1_b"])), blk["c1_w"], blk["c1_b"], 1, 1)
        h = conv1d(silu(gn(h, blk["gn2_g"], blk["gn2_b"])), blk["c2_w"], blk["c2_b"], 1, 1)
        x = h + x
    return x


# ----------------------------------------------------------------------------
# Deterministic parameter init (shapes match the nn.Module __init__)
# ----------------------------------------------------------------------------
def init_params(key, in_channels, out_channels, factor, num_layers, kernel_multiplier=2):
    K_ds = factor * kernel_multiplier + 1
    C = out_channels  # channels after pre-downsample
    n_keys = 2 + num_layers * 4
    keys = iter(jax.random.split(key, n_keys))

    def w(shape, k):
        return (0.1 * jax.random.normal(k, shape)).astype(jnp.float32)

    params = {
        "ds_w": w((out_channels, in_channels, K_ds), next(keys)),
        "ds_b": w((out_channels,), next(keys)),
        "blocks": [],
    }
    for _ in range(num_layers):
        blk = {
            "gn1_g": jnp.ones((C,), jnp.float32),
            "gn1_b": jnp.zeros((C,), jnp.float32),
            "c1_w": w((C, C, 3), next(keys)),
            "c1_b": w((C,), next(keys)),
            "gn2_g": jnp.ones((C,), jnp.float32) * 1.1,
            "gn2_b": jnp.ones((C,), jnp.float32) * 0.05,
            "c2_w": w((C, C, 3), next(keys)),
            "c2_b": w((C,), next(keys)),
        }
        params["blocks"].append(blk)
    return params


if __name__ == "__main__":
    B, IN_CH, OUT_CH = 2, 8, 16
    L, FACTOR, NUM_GROUPS, NUM_LAYERS = 16, 2, 4, 2

    key = jax.random.PRNGKey(0)
    kx, kp = jax.random.split(key)
    x = jax.random.normal(kx, (B, IN_CH, L), dtype=jnp.float32)
    params = init_params(kp, IN_CH, OUT_CH, FACTOR, NUM_LAYERS)

    out = downsample_block_1d(x, params, factor=FACTOR, num_groups=NUM_GROUPS)
    out = jax.block_until_ready(out)

    ref = _ref_forward(x, params, factor=FACTOR, num_groups=NUM_GROUPS)
    assert out.shape == (B, OUT_CH, L // FACTOR), out.shape
    err = float(jnp.max(jnp.abs(out - ref)))
    assert jnp.allclose(out, ref, atol=5e-4, rtol=5e-4), err

    print("KERNEL_OK")
</pallas_src>

<mosaic_0001>
module attributes {stable_mosaic.version = 11 : i64} {
  func.func @down_block_kernel(%arg0: i32, %arg1: memref<1x16x10xf32, #tpu.memory_space<vmem>>, %arg2: memref<16x48xf32, #tpu.memory_space<vmem>>, %arg3: memref<16x1xf32, #tpu.memory_space<vmem>>, %arg4: memref<16x16xf32, #tpu.memory_space<vmem>>, %arg5: memref<2x16x1xf32, #tpu.memory_space<vmem>>, %arg6: memref<2x16x1xf32, #tpu.memory_space<vmem>>, %arg7: memref<2x16x48xf32, #tpu.memory_space<vmem>>, %arg8: memref<2x16x1xf32, #tpu.memory_space<vmem>>, %arg9: memref<2x16x1xf32, #tpu.memory_space<vmem>>, %arg10: memref<2x16x1xf32, #tpu.memory_space<vmem>>, %arg11: memref<2x16x48xf32, #tpu.memory_space<vmem>>, %arg12: memref<2x16x1xf32, #tpu.memory_space<vmem>>, %arg13: memref<1x16x8xf32, #tpu.memory_space<vmem>>, %arg14: memref<16x10xf32, #tpu.memory_space<vmem>>) attributes {dimension_semantics = [#tpu.dimension_semantics<parallel>], iteration_bounds = array<i64: 2>, scalar_prefetch = 0 : i64, scratch_operands = 1 : i64, tpu.core_type = #tpu.core_type<tc>, window_params = [{transform_indices = @transform_0, window_bounds = array<i64: 1, 16, 10>}, {pipeline_mode = #tpu.pipeline_mode<synchronous>, transform_indices = @transform_1, window_bounds = array<i64: 16, 48>}, {pipeline_mode = #tpu.pipeline_mode<synchronous>, transform_indices = @transform_2, window_bounds = array<i64: 16, 1>}, {pipeline_mode = #tpu.pipeline_mode<synchronous>, transform_indices = @transform_3, window_bounds = array<i64: 16, 16>}, {pipeline_mode = #tpu.pipeline_mode<synchronous>, transform_indices = @transform_4, window_bounds = array<i64: 2, 16, 1>}, {pipeline_mode = #tpu.pipeline_mode<synchronous>, transform_indices = @transform_5, window_bounds = array<i64: 2, 16, 1>}, {pipeline_mode = #tpu.pipeline_mode<synchronous>, transform_indices = @transform_6, window_bounds = array<i64: 2, 16, 48>}, {pipeline_mode = #tpu.pipeline_mode<synchronous>, transform_indices = @transform_7, window_bounds = array<i64: 2, 16, 1>}, {pipeline_mode = #tpu.pipeline_mode<synchronous>, transform_indices = @transform_8, window_bounds = array<i64: 2, 16, 1>}, {pipeline_mode = #tpu.pipeline_mode<synchronous>, transform_indices = @transform_9, window_bounds = array<i64: 2, 16, 1>}, {pipeline_mode = #tpu.pipeline_mode<synchronous>, transform_indices = @transform_10, window_bounds = array<i64: 2, 16, 48>}, {pipeline_mode = #tpu.pipeline_mode<synchronous>, transform_indices = @transform_11, window_bounds = array<i64: 2, 16, 1>}, {transform_indices = @transform_12, window_bounds = array<i64: 1, 16, 8>}]} {
    %c0 = arith.constant 0 : index
    %c0_0 = arith.constant 0 : index
    %c0_1 = arith.constant 0 : index
    %0 = vector.load %arg1[%c0, %c0_0, %c0_1] : memref<1x16x10xf32, #tpu.memory_space<vmem>>, vector<1x16x8xf32>
    %1 = vector.shape_cast %0 : vector<1x16x8xf32> to vector<16x8xf32>
    %c0_2 = arith.constant 0 : index
    %c0_3 = arith.constant 0 : index
    %c1 = arith.constant 1 : index
    %2 = vector.load %arg1[%c0_2, %c0_3, %c1] : memref<1x16x10xf32, #tpu.memory_space<vmem>>, vector<1x16x8xf32>
    %3 = vector.shape_cast %2 : vector<1x16x8xf32> to vector<16x8xf32>
    %c0_4 = arith.constant 0 : index
    %c0_5 = arith.constant 0 : index
    %c2 = arith.constant 2 : index
    %4 = vector.load %arg1[%c0_4, %c0_5, %c2] : memref<1x16x10xf32, #tpu.memory_space<vmem>>, vector<1x16x8xf32>
    %5 = vector.shape_cast %4 : vector<1x16x8xf32> to vector<16x8xf32>
    %6 = tpu.concatenate %1, %3, %5 in 0 : vector<16x8xf32>, vector<16x8xf32>, vector<16x8xf32> -> vector<48x8xf32>
    %c0_6 = arith.constant 0 : index
    %c0_7 = arith.constant 0 : index
    %7 = vector.load %arg2[%c0_6, %c0_7] : memref<16x48xf32, #tpu.memory_space<vmem>>, vector<16x48xf32>
    %cst = arith.constant dense<0.000000e+00> : vector<16x8xf32>
    %8 = tpu.matmul %7, %6, %cst {dimension_numbers = #tpu.dot_dimension_numbers<[1], [0], [0], [1], [0, 0, 1, 1], [], []>} : vector<16x48xf32>, vector<48x8xf32>, vector<16x8xf32> -> vector<16x8xf32>
    %c0_8 = arith.constant 0 : index
    %c0_9 = arith.constant 0 : index
    %9 = vector.load %arg3[%c0_8, %c0_9] : memref<16x1xf32, #tpu.memory_space<vmem>>, vector<16x1xf32>
    %10 = vector.broadcast %9 : vector<16x1xf32> to vector<16x8xf32>
    %11 = arith.addf %8, %10 : vector<16x8xf32>
    %cst_10 = arith.constant 0.000000e+00 : f32
    %12 = vector.broadcast %cst_10 : f32 to vector<16x10xf32>
    %c0_11 = arith.constant 0 : index
    %c0_12 = arith.constant 0 : index
    %13 = vector.load %arg14[%c0_11, %c0_12] : memref<16x10xf32, #tpu.memory_space<vmem>>, vector<16x10xf32>
    tpu.vector_store %arg14[%c0_11, %c0_12], %12 {strides = array<i32>} : memref<16x10xf32, #tpu.memory_space<vmem>>, vector<16x10xf32>,
    %c0_13 = arith.constant 0 : index
    %c0_14 = arith.constant 0 : index
    %14 = vector.load %arg4[%c0_13, %c0_14] : memref<16x16xf32, #tpu.memory_space<vmem>>, vector<16x16xf32>
    %c0_15 = arith.constant 0 : index
    %c0_16 = arith.constant 0 : index
    %c0_17 = arith.constant 0 : index
    %15 = vector.load %arg5[%c0_15, %c0_16, %c0_17] : memref<2x16x1xf32, #tpu.memory_space<vmem>>, vector<1x16x1xf32>
    %16 = vector.shape_cast %15 : vector<1x16x1xf32> to vector<16x1xf32>
    %c0_18 = arith.constant 0 : index
    %c0_19 = arith.constant 0 : index
    %c0_20 = arith.constant 0 : index
    %17 = vector.load %arg6[%c0_18, %c0_19, %c0_20] : memref<2x16x1xf32, #tpu.memory_space<vmem>>, vector<1x16x1xf32>
    %18 = vector.shape_cast %17 : vector<1x16x1xf32> to vector<16x1xf32>
    %c0_21 = arith.constant 0 : index
    %c0_22 = arith.constant 0 : index
    %c0_23 = arith.constant 0 : index
    %19 = vector.load %arg7[%c0_21, %c0_22, %c0_23] : memref<2x16x48xf32, #tpu.memory_space<vmem>>, vector<1x16x48xf32>
    %20 = vector.shape_cast %19 : vector<1x16x48xf32> to vector<16x48xf32>
    %c0_24 = arith.constant 0 : index
    %c0_25 = arith.constant 0 : index
    %c0_26 = arith.constant 0 : index
    %21 = vector.load %arg8[%c0_24, %c0_25, %c0_26] : memref<2x16x1xf32, #tpu.memory_space<vmem>>, vector<1x16x1xf32>
    %22 = vector.shape_cast %21 : vector<1x16x1xf32> to vector<16x1xf32>
    %cst_27 = arith.constant dense<0.000000e+00> : vector<16xf32>
    %23 = vector.multi_reduction <add>, %11, %cst_27 [1] : vector<16x8xf32> to vector<16xf32>
    %24 = vector.shape_cast %23 : vector<16xf32> to vector<16x1xf32>
    %25 = arith.mulf %11, %11 : vector<16x8xf32>
    %cst_28 = arith.constant dense<0.000000e+00> : vector<16xf32>
    %26 = vector.multi_reduction <add>, %25, %cst_28 [1] : vector<16x8xf32> to vector<16xf32>
    %27 = vector.shape_cast %26 : vector<16xf32> to vector<16x1xf32>
    %cst_29 = arith.constant dense<0.000000e+00> : vector<16x1xf32>
    %28 = tpu.matmul %14, %24, %cst_29 {dimension_numbers = #tpu.dot_dimension_numbers<[1], [0], [0], [1], [0, 0, 1, 1], [], []>} : vector<16x16xf32>, vector<16x1xf32>, vector<16x1xf32> -> vector<16x1xf32>
    %cst_30 = arith.constant dense<0.000000e+00> : vector<16x1xf32>
    %29 = tpu.matmul %14, %27, %cst_30 {dimension_numbers = #tpu.dot_dimension_numbers<[1], [0], [0], [1], [0, 0, 1, 1], [], []>} : vector<16x16xf32>, vector<16x1xf32>, vector<16x1xf32> -> vector<16x1xf32>
    %30 = arith.mulf %28, %28 : vector<16x1xf32>
    %31 = arith.subf %29, %30 : vector<16x1xf32>
    %cst_31 = arith.constant 9.99999974E-6 : f32
    %32 = vector.broadcast %cst_31 : f32 to vector<16x1xf32>
    %33 = arith.addf %31, %32 : vector<16x1xf32>
    %34 = math.rsqrt %33 : vector<16x1xf32>
    %35 = arith.mulf %16, %34 : vector<16x1xf32>
    %36 = arith.mulf %28, %35 : vector<16x1xf32>
    %37 = arith.subf %18, %36 : vector<16x1xf32>
    %38 = vector.broadcast %35 : vector<16x1xf32> to vector<16x8xf32>
    %39 = arith.mulf %11, %38 : vector<16x8xf32>
    %40 = vector.broadcast %37 : vector<16x1xf32> to vector<16x8xf32>
    %41 = arith.addf %39, %40 : vector<16x8xf32>
    %42 = arith.negf %41 : vector<16x8xf32>
    %43 = math.exp %42 : vector<16x8xf32>
    %cst_32 = arith.constant 1.000000e+00 : f32
    %44 = vector.broadcast %cst_32 : f32 to vector<16x8xf32>
    %45 = arith.addf %44, %43 : vector<16x8xf32>
    %46 = arith.divf %44, %45 : vector<16x8xf32>
    %47 = arith.mulf %41, %46 : vector<16x8xf32>
    %c0_33 = arith.constant 0 : index
    %c1_34 = arith.constant 1 : index
    %48 = vector.load %arg14[%c0_33, %c1_34] : memref<16x10xf32, #tpu.memory_space<vmem>>, vector<16x8xf32>
    tpu.vector_store %arg14[%c0_33, %c1_34], %47 {strides = array<i32>} : memref<16x10xf32, #tpu.memory_space<vmem>>, vector<16x8xf32>,
    %c0_35 = arith.constant 0 : index
    %c0_36 = arith.constant 0 : index
    %49 = vector.load %arg14[%c0_35, %c0_36] : memref<16x10xf32, #tpu.memory_space<vmem>>, vector<16x8xf32>
    %c0_37 = arith.constant 0 : index
    %c2_38 = arith.constant 2 : index
    %50 = vector.load %arg14[%c0_37, %c2_38] : memref<16x10xf32, #tpu.memory_space<vmem>>, vector<16x8xf32>
    %51 = tpu.concatenate %49, %47, %50 in 0 : vector<16x8xf32>, vector<16x8xf32>, vector<16x8xf32> -> vector<48x8xf32>
    %cst_39 = arith.constant dense<0.000000e+00> : vector<16x8xf32>
    %52 = tpu.matmul %20, %51, %cst_39 {dimension_numbers = #tpu.dot_dimension_numbers<[1], [0], [0], [1], [0, 0, 1, 1], [], []>} : vector<16x48xf32>, vector<48x8xf32>, vector<16x8xf32> -> vector<16x8xf32>
    %53 = vector.broadcast %22 : vector<16x1xf32> to vector<16x8xf32>
    %54 = arith.addf %52, %53 : vector<16x8xf32>
    %c0_40 = arith.constant 0 : index
    %c0_41 = arith.constant 0 : index
    %c0_42 = arith.constant 0 : index
    %55 = vector.load %arg9[%c0_40, %c0_41, %c0_42] : memref<2x16x1xf32, #tpu.memory_space<vmem>>, vector<1x16x1xf32>
    %56 = vector.shape_cast %55 : vector<1x16x1xf32> to vector<16x1xf32>
    %c0_43 = arith.constant 0 : index
    %c0_44 = arith.constant 0 : index
    %c0_45 = arith.constant 0 : index
    %57 = vector.load %arg10[%c0_43, %c0_44, %c0_45] : memref<2x16x1xf32, #tpu.memory_space<vmem>>, vector<1x16x1xf32>
    %58 = vector.shape_cast %57 : vector<1x16x1xf32> to vector<16x1xf32>
    %c0_46 = arith.constant 0 : index
    %c0_47 = arith.constant 0 : index
    %c0_48 = arith.constant 0 : index
    %59 = vector.load %arg11[%c0_46, %c0_47, %c0_48] : memref<2x16x48xf32, #tpu.memory_space<vmem>>, vector<1x16x48xf32>
    %60 = vector.shape_cast %59 : vector<1x16x48xf32> to vector<16x48xf32>
    %c0_49 = arith.constant 0 : index
    %c0_50 = arith.constant 0 : index
    %c0_51 = arith.constant 0 : index
    %61 = vector.load %arg12[%c0_49, %c0_50, %c0_51] : memref<2x16x1xf32, #tpu.memory_space<vmem>>, vector<1x16x1xf32>
    %62 = vector.shape_cast %61 : vector<1x16x1xf32> to vector<16x1xf32>
    %cst_52 = arith.constant dense<0.000000e+00> : vector<16xf32>
    %63 = vector.multi_reduction <add>, %54, %cst_52 [1] : vector<16x8xf32> to vector<16xf32>
    %64 = vector.shape_cast %63 : vector<16xf32> to vector<16x1xf32>
    %65 = arith.mulf %54, %54 : vector<16x8xf32>
    %cst_53 = arith.constant dense<0.000000e+00> : vector<16xf32>
    %66 = vector.multi_reduction <add>, %65, %cst_53 [1] : vector<16x8xf32> to vector<16xf32>
    %67 = vector.shape_cast %66 : vector<16xf32> to vector<16x1xf32>
    %cst_54 = arith.constant dense<0.000000e+00> : vector<16x1xf32>
    %68 = tpu.matmul %14, %64, %cst_54 {dimension_numbers = #tpu.dot_dimension_numbers<[1], [0], [0], [1], [0, 0, 1, 1], [], []>} : vector<16x16xf32>, vector<16x1xf32>, vector<16x1xf32> -> vector<16x1xf32>
    %cst_55 = arith.constant dense<0.000000e+00> : vector<16x1xf32>
    %69 = tpu.matmul %14, %67, %cst_55 {dimension_numbers = #tpu.dot_dimension_numbers<[1], [0], [0], [1], [0, 0, 1, 1], [], []>} : vector<16x16xf32>, vector<16x1xf32>, vector<16x1xf32> -> vector<16x1xf32>
    %70 = arith.mulf %68, %68 : vector<16x1xf32>
    %71 = arith.subf %69, %70 : vector<16x1xf32>
    %cst_56 = arith.constant 9.99999974E-6 : f32
    %72 = vector.broadcast %cst_56 : f32 to vector<16x1xf32>
    %73 = arith.addf %71, %72 : vector<16x1xf32>
    %74 = math.rsqrt %73 : vector<16x1xf32>
    %75 = arith.mulf %56, %74 : vector<16x1xf32>
    %76 = arith.mulf %68, %75 : vector<16x1xf32>
    %77 = arith.subf %58, %76 : vector<16x1xf32>
    %78 = vector.broadcast %75 : vector<16x1xf32> to vector<16x8xf32>
    %79 = arith.mulf %54, %78 : vector<16x8xf32>
    %80 = vector.broadcast %77 : vector<16x1xf32> to vector<16x8xf32>
    %81 = arith.addf %79, %80 : vector<16x8xf32>
    %82 = arith.negf %81 : vector<16x8xf32>
    %83 = math.exp %82 : vector<16x8xf32>
    %cst_57 = arith.constant 1.000000e+00 : f32
    %84 = vector.broadcast %cst_57 : f32 to vector<16x8xf32>
    %85 = arith.addf %84, %83 : vector<16x8xf32>
    %86 = arith.divf %84, %85 : vector<16x8xf32>
    %87 = arith.mulf %81, %86 : vector<16x8xf32>
    %c0_58 = arith.constant 0 : index
    %c1_59 = arith.constant 1 : index
    %88 = vector.load %arg14[%c0_58, %c1_59] : memref<16x10xf32, #tpu.memory_space<vmem>>, vector<16x8xf32>
    tpu.vector_store %arg14[%c0_58, %c1_59], %87 {strides = array<i32>} : memref<16x10xf32, #tpu.memory_space<vmem>>, vector<16x8xf32>,
    %c0_60 = arith.constant 0 : index
    %c0_61 = arith.constant 0 : index
    %89 = vector.load %arg14[%c0_60, %c0_61] : memref<16x10xf32, #tpu.memory_space<vmem>>, vector<16x8xf32>
    %c0_62 = arith.constant 0 : index
    %c2_63 = arith.constant 2 : index
    %90 = vector.load %arg14[%c0_62, %c2_63] : memref<16x10xf32, #tpu.memory_space<vmem>>, vector<16x8xf32>
    %91 = tpu.concatenate %89, %87, %90 in 0 : vector<16x8xf32>, vector<16x8xf32>, vector<16x8xf32> -> vector<48x8xf32>
    %cst_64 = arith.constant dense<0.000000e+00> : vector<16x8xf32>
    %92 = tpu.matmul %60, %91, %cst_64 {dimension_numbers = #tpu.dot_dimension_numbers<[1], [0], [0], [1], [0, 0, 1, 1], [], []>} : vector<16x48xf32>, vector<48x8xf32>, vector<16x8xf32> -> vector<16x8xf32>
    %93 = vector.broadcast %62 : vector<16x1xf32> to vector<16x8xf32>
    %94 = arith.addf %92, %93 : vector<16x8xf32>
    %95 = arith.addf %94, %11 : vector<16x8xf32>
    %c1_65 = arith.constant 1 : index
    %c0_66 = arith.constant 0 : index
    %c0_67 = arith.constant 0 : index
    %96 = vector.load %arg5[%c1_65, %c0_66, %c0_67] : memref<2x16x1xf32, #tpu.memory_space<vmem>>, vector<1x16x1xf32>
    %97 = vector.shape_cast %96 : vector<1x16x1xf32> to vector<16x1xf32>
    %c1_68 = arith.constant 1 : index
    %c0_69 = arith.constant 0 : index
    %c0_70 = arith.constant 0 : index
    %98 = vector.load %arg6[%c1_68, %c0_69, %c0_70] : memref<2x16x1xf32, #tpu.memory_space<vmem>>, vector<1x16x1xf32>
    %99 = vector.shape_cast %98 : vector<1x16x1xf32> to vector<16x1xf32>
    %c1_71 = arith.constant 1 : index
    %c0_72 = arith.constant 0 : index
    %c0_73 = arith.constant 0 : index
    %100 = vector.load %arg7[%c1_71, %c0_72, %c0_73] : memref<2x16x48xf32, #tpu.memory_space<vmem>>, vector<1x16x48xf32>
    %101 = vector.shape_cast %100 : vector<1x16x48xf32> to vector<16x48xf32>
    %c1_74 = arith.constant 1 : index
    %c0_75 = arith.constant 0 : index
    %c0_76 = arith.constant 0 : index
    %102 = vector.load %arg8[%c1_74, %c0_75, %c0_76] : memref<2x16x1xf32, #tpu.memory_space<vmem>>, vector<1x16x1xf32>
    %103 = vector.shape_cast %102 : vector<1x16x1xf32> to vector<16x1xf32>
    %cst_77 = arith.constant dense<0.000000e+00> : vector<16xf32>
    %104 = vector.multi_reduction <add>, %95, %cst_77 [1] : vector<16x8xf32> to vector<16xf32>
    %105 = vector.shape_cast %104 : vector<16xf32> to vector<16x1xf32>
    %106 = arith.mulf %95, %95 : vector<16x8xf32>
    %cst_78 = arith.constant dense<0.000000e+00> : vector<16xf32>
    %107 = vector.multi_reduction <add>, %106, %cst_78 [1] : vector<16x8xf32> to vector<16xf32>
    %108 = vector.shape_cast %107 : vector<16xf32> to vector<16x1xf32>
    %cst_79 = arith.constant dense<0.000000e+00> : vector<16x1xf32>
    %109 = tpu.matmul %14, %105, %cst_79 {dimension_numbers = #tpu.dot_dimension_numbers<[1], [0], [0], [1], [0, 0, 1, 1], [], []>} : vector<16x16xf32>, vector<16x1xf32>, vector<16x1xf32> -> vector<16x1xf32>
    %cst_80 = arith.constant dense<0.000000e+00> : vector<16x1xf32>
    %110 = tpu.matmul %14, %108, %cst_80 {dimension_numbers = #tpu.dot_dimension_numbers<[1], [0], [0], [1], [0, 0, 1, 1], [], []>} : vector<16x16xf32>, vector<16x1xf32>, vector<16x1xf32> -> vector<16x1xf32>
    %111 = arith.mulf %109, %109 : vector<16x1xf32>
    %112 = arith.subf %110, %111 : vector<16x1xf32>
    %cst_81 = arith.constant 9.99999974E-6 : f32
    %113 = vector.broadcast %cst_81 : f32 to vector<16x1xf32>
    %114 = arith.addf %112, %113 : vector<16x1xf32>
    %115 = math.rsqrt %114 : vector<16x1xf32>
    %116 = arith.mulf %97, %115 : vector<16x1xf32>
    %117 = arith.mulf %109, %116 : vector<16x1xf32>
    %118 = arith.subf %99, %117 : vector<16x1xf32>
    %119 = vector.broadcast %116 : vector<16x1xf32> to vector<16x8xf32>
    %120 = arith.mulf %95, %119 : vector<16x8xf32>
    %121 = vector.broadcast %118 : vector<16x1xf32> to vector<16x8xf32>
    %122 = arith.addf %120, %121 : vector<16x8xf32>
    %123 = arith.negf %122 : vector<16x8xf32>
    %124 = math.exp %123 : vector<16x8xf32>
    %cst_82 = arith.constant 1.000000e+00 : f32
    %125 = vector.broadcast %cst_82 : f32 to vector<16x8xf32>
    %126 = arith.addf %125, %124 : vector<16x8xf32>
    %127 = arith.divf %125, %126 : vector<16x8xf32>
    %128 = arith.mulf %122, %127 : vector<16x8xf32>
    %c0_83 = arith.constant 0 : index
    %c1_84 = arith.constant 1 : index
    %129 = vector.load %arg14[%c0_83, %c1_84] : memref<16x10xf32, #tpu.memory_space<vmem>>, vector<16x8xf32>
    tpu.vector_store %arg14[%c0_83, %c1_84], %128 {strides = array<i32>} : memref<16x10xf32, #tpu.memory_space<vmem>>, vector<16x8xf32>,
    %c0_85 = arith.constant 0 : index
    %c0_86 = arith.constant 0 : index
    %130 = vector.load %arg14[%c0_85, %c0_86] : memref<16x10xf32, #tpu.memory_space<vmem>>, vector<16x8xf32>
    %c0_87 = arith.constant 0 : index
    %c2_88 = arith.constant 2 : index
    %131 = vector.load %arg14[%c0_87, %c2_88] : memref<16x10xf32, #tpu.memory_space<vmem>>, vector<16x8xf32>
    %132 = tpu.concatenate %130, %128, %131 in 0 : vector<16x8xf32>, vector<16x8xf32>, vector<16x8xf32> -> vector<48x8xf32>
    %cst_89 = arith.constant dense<0.000000e+00> : vector<16x8xf32>
    %133 = tpu.matmul %101, %132, %cst_89 {dimension_numbers = #tpu.dot_dimension_numbers<[1], [0], [0], [1], [0, 0, 1, 1], [], []>} : vector<16x48xf32>, vector<48x8xf32>, vector<16x8xf32> -> vector<16x8xf32>
    %134 = vector.broadcast %103 : vector<16x1xf32> to vector<16x8xf32>
    %135 = arith.addf %133, %134 : vector<16x8xf32>
    %c1_90 = arith.constant 1 : index
    %c0_91 = arith.constant 0 : index
    %c0_92 = arith.constant 0 : index
    %136 = vector.load %arg9[%c1_90, %c0_91, %c0_92] : memref<2x16x1xf32, #tpu.memory_space<vmem>>, vector<1x16x1xf32>
    %137 = vector.shape_cast %136 : vector<1x16x1xf32> to vector<16x1xf32>
    %c1_93 = arith.constant 1 : index
    %c0_94 = arith.constant 0 : index
    %c0_95 = arith.constant 0 : index
    %138 = vector.load %arg10[%c1_93, %c0_94, %c0_95] : memref<2x16x1xf32, #tpu.memory_space<vmem>>, vector<1x16x1xf32>
    %139 = vector.shape_cast %138 : vector<1x16x1xf32> to vector<16x1xf32>
    %c1_96 = arith.constant 1 : index
    %c0_97 = arith.constant 0 : index
    %c0_98 = arith.constant 0 : index
    %140 = vector.load %arg11[%c1_96, %c0_97, %c0_98] : memref<2x16x48xf32, #tpu.memory_space<vmem>>, vector<1x16x48xf32>
    %141 = vector.shape_cast %140 : vector<1x16x48xf32> to vector<16x48xf32>
    %c1_99 = arith.constant 1 : index
    %c0_100 = arith.constant 0 : index
    %c0_101 = arith.constant 0 : index
    %142 = vector.load %arg12[%c1_99, %c0_100, %c0_101] : memref<2x16x1xf32, #tpu.memory_space<vmem>>, vector<1x16x1xf32>
    %143 = vector.shape_cast %142 : vector<1x16x1xf32> to vector<16x1xf32>
    %cst_102 = arith.constant dense<0.000000e+00> : vector<16xf32>
    %144 = vector.multi_reduction <add>, %135, %cst_102 [1] : vector<16x8xf32> to vector<16xf32>
    %145 = vector.shape_cast %144 : vector<16xf32> to vector<16x1xf32>
    %146 = arith.mulf %135, %135 : vector<16x8xf32>
    %cst_103 = arith.constant dense<0.000000e+00> : vector<16xf32>
    %147 = vector.multi_reduction <add>, %146, %cst_103 [1] : vector<16x8xf32> to vector<16xf32>
    %148 = vector.shape_cast %147 : vector<16xf32> to vector<16x1xf32>
    %cst_104 = arith.constant dense<0.000000e+00> : vector<16x1xf32>
    %149 = tpu.matmul %14, %145, %cst_104 {dimension_numbers = #tpu.dot_dimension_numbers<[1], [0], [0], [1], [0, 0, 1, 1], [], []>} : vector<16x16xf32>, vector<16x1xf32>, vector<16x1xf32> -> vector<16x1xf32>
    %cst_105 = arith.constant dense<0.000000e+00> : vector<16x1xf32>
    %150 = tpu.matmul %14, %148, %cst_105 {dimension_numbers = #tpu.dot_dimension_numbers<[1], [0], [0], [1], [0, 0, 1, 1], [], []>} : vector<16x16xf32>, vector<16x1xf32>, vector<16x1xf32> -> vector<16x1xf32>
    %151 = arith.mulf %149, %149 : vector<16x1xf32>
    %152 = arith.subf %150, %151 : vector<16x1xf32>
    %cst_106 = arith.constant 9.99999974E-6 : f32
    %153 = vector.broadcast %cst_106 : f32 to vector<16x1xf32>
    %154 = arith.addf %152, %153 : vector<16x1xf32>
    %155 = math.rsqrt %154 : vector<16x1xf32>
    %156 = arith.mulf %137, %155 : vector<16x1xf32>
    %157 = arith.mulf %149, %156 : vector<16x1xf32>
    %158 = arith.subf %139, %157 : vector<16x1xf32>
    %159 = vector.broadcast %156 : vector<16x1xf32> to vector<16x8xf32>
    %160 = arith.mulf %135, %159 : vector<16x8xf32>
    %161 = vector.broadcast %158 : vector<16x1xf32> to vector<16x8xf32>
    %162 = arith.addf %160, %161 : vector<16x8xf32>
    %163 = arith.negf %162 : vector<16x8xf32>
    %164 = math.exp %163 : vector<16x8xf32>
    %cst_107 = arith.constant 1.000000e+00 : f32
    %165 = vector.broadcast %cst_107 : f32 to vector<16x8xf32>
    %166 = arith.addf %165, %164 : vector<16x8xf32>
    %167 = arith.divf %165, %166 : vector<16x8xf32>
    %168 = arith.mulf %162, %167 : vector<16x8xf32>
    %c0_108 = arith.constant 0 : index
    %c1_109 = arith.constant 1 : index
    %169 = vector.load %arg14[%c0_108, %c1_109] : memref<16x10xf32, #tpu.memory_space<vmem>>, vector<16x8xf32>
    tpu.vector_store %arg14[%c0_108, %c1_109], %168 {strides = array<i32>} : memref<16x10xf32, #tpu.memory_space<vmem>>, vector<16x8xf32>,
    %c0_110 = arith.constant 0 : index
    %c0_111 = arith.constant 0 : index
    %170 = vector.load %arg14[%c0_110, %c0_111] : memref<16x10xf32, #tpu.memory_space<vmem>>, vector<16x8xf32>
    %c0_112 = arith.constant 0 : index
    %c2_113 = arith.constant 2 : index
    %171 = vector.load %arg14[%c0_112, %c2_113] : memref<16x10xf32, #tpu.memory_space<vmem>>, vector<16x8xf32>
    %172 = tpu.concatenate %170, %168, %171 in 0 : vector<16x8xf32>, vector<16x8xf32>, vector<16x8xf32> -> vector<48x8xf32>
    %cst_114 = arith.constant dense<0.000000e+00> : vector<16x8xf32>
    %173 = tpu.matmul %141, %172, %cst_114 {dimension_numbers = #tpu.dot_dimension_numbers<[1], [0], [0], [1], [0, 0, 1, 1], [], []>} : vector<16x48xf32>, vector<48x8xf32>, vector<16x8xf32> -> vector<16x8xf32>
    %174 = vector.broadcast %143 : vector<16x1xf32> to vector<16x8xf32>
    %175 = arith.addf %173, %174 : vector<16x8xf32>
    %176 = arith.addf %175, %95 : vector<16x8xf32>
    %c0_115 = arith.constant 0 : index
    %c0_116 = arith.constant 0 : index
    %c0_117 = arith.constant 0 : index
    %177 = vector.load %arg13[%c0_115, %c0_116, %c0_117] : memref<1x16x8xf32, #tpu.memory_space<vmem>>, vector<1x16x8xf32>
    %178 = vector.shape_cast %177 : vector<1x16x8xf32> to vector<16x8xf32>
    %179 = vector.shape_cast %176 : vector<16x8xf32> to vector<1x16x8xf32>
    tpu.vector_store %arg13[%c0_115, %c0_116, %c0_117], %179 {strides = array<i32>} : memref<1x16x8xf32, #tpu.memory_space<vmem>>, vector<1x16x8xf32>,
    return
  }
  func.func @transform_0(%arg0: i32) -> (i32, i32, i32) {
    %c0_i32 = arith.constant 0 : i32
    %c0_i32_0 = arith.constant 0 : i32
    %c0_i32_1 = arith.constant 0 : i32
    return %arg0, %c0_i32, %c0_i32_0 : i32, i32, i32
  }
  func.func @transform_1(%arg0: i32) -> (i32, i32) {
    %c0_i32 = arith.constant 0 : i32
    %c0_i32_0 = arith.constant 0 : i32
    %c0_i32_1 = arith.constant 0 : i32
    return %c0_i32, %c0_i32_0 : i32, i32
  }
  func.func @transform_2(%arg0: i32) -> (i32, i32) {
    %c0_i32 = arith.constant 0 : i32
    %c0_i32_0 = arith.constant 0 : i32
    %c0_i32_1 = arith.constant 0 : i32
    return %c0_i32, %c0_i32_0 : i32, i32
  }
  func.func @transform_3(%arg0: i32) -> (i32, i32) {
    %c0_i32 = arith.constant 0 : i32
    %c0_i32_0 = arith.constant 0 : i32
    %c0_i32_1 = arith.constant 0 : i32
    return %c0_i32, %c0_i32_0 : i32, i32
  }
  func.func @transform_4(%arg0: i32) -> (i32, i32, i32) {
    %c0_i32 = arith.constant 0 : i32
    %c0_i32_0 = arith.constant 0 : i32
    %c0_i32_1 = arith.constant 0 : i32
    %c0_i32_2 = arith.constant 0 : i32
    return %c0_i32, %c0_i32_0, %c0_i32_1 : i32, i32, i32
  }
  func.func @transform_5(%arg0: i32) -> (i32, i32, i32) {
    %c0_i32 = arith.constant 0 : i32
    %c0_i32_0 = arith.constant 0 : i32
    %c0_i32_1 = arith.constant 0 : i32
    %c0_i32_2 = arith.constant 0 : i32
    return %c0_i32, %c0_i32_0, %c0_i32_1 : i32, i32, i32
  }
  func.func @transform_6(%arg0: i32) -> (i32, i32, i32) {
    %c0_i32 = arith.constant 0 : i32
    %c0_i32_0 = arith.constant 0 : i32
    %c0_i32_1 = arith.constant 0 : i32
    %c0_i32_2 = arith.constant 0 : i32
    return %c0_i32, %c0_i32_0, %c0_i32_1 : i32, i32, i32
  }
  func.func @transform_7(%arg0: i32) -> (i32, i32, i32) {
    %c0_i32 = arith.constant 0 : i32
    %c0_i32_0 = arith.constant 0 : i32
    %c0_i32_1 = arith.constant 0 : i32
    %c0_i32_2 = arith.constant 0 : i32
    return %c0_i32, %c0_i32_0, %c0_i32_1 : i32, i32, i32
  }
  func.func @transform_8(%arg0: i32) -> (i32, i32, i32) {
    %c0_i32 = arith.constant 0 : i32
    %c0_i32_0 = arith.constant 0 : i32
    %c0_i32_1 = arith.constant 0 : i32
    %c0_i32_2 = arith.constant 0 : i32
    return %c0_i32, %c0_i32_0, %c0_i32_1 : i32, i32, i32
  }
  func.func @transform_9(%arg0: i32) -> (i32, i32, i32) {
    %c0_i32 = arith.constant 0 : i32
    %c0_i32_0 = arith.constant 0 : i32
    %c0_i32_1 = arith.constant 0 : i32
    %c0_i32_2 = arith.constant 0 : i32
    return %c0_i32, %c0_i32_0, %c0_i32_1 : i32, i32, i32
  }
  func.func @transform_10(%arg0: i32) -> (i32, i32, i32) {
    %c0_i32 = arith.constant 0 : i32
    %c0_i32_0 = arith.constant 0 : i32
    %c0_i32_1 = arith.constant 0 : i32
    %c0_i32_2 = arith.constant 0 : i32
    return %c0_i32, %c0_i32_0, %c0_i32_1 : i32, i32, i32
  }
  func.func @transform_11(%arg0: i32) -> (i32, i32, i32) {
    %c0_i32 = arith.constant 0 : i32
    %c0_i32_0 = arith.constant 0 : i32
    %c0_i32_1 = arith.constant 0 : i32
    %c0_i32_2 = arith.constant 0 : i32
    return %c0_i32, %c0_i32_0, %c0_i32_1 : i32, i32, i32
  }
  func.func @transform_12(%arg0: i32) -> (i32, i32, i32) {
    %c0_i32 = arith.constant 0 : i32
    %c0_i32_0 = arith.constant 0 : i32
    %c0_i32_1 = arith.constant 0 : i32
    return %arg0, %c0_i32, %c0_i32_0 : i32, i32, i32
  }
}

</mosaic_0001>

<llo_original>
// kernel: tpu_custom_call.1
$region0: #{tpu_custom_call.1}
  #allocation0 [shape = 'u32[]', space=smem, size = 0x4, offset = 0x4, fixed_abs, tag = 'smem constant byte address 0x4 - core index']
  #allocation1 [shape = 'u32[144,128]{1,0:T(1,128)}', space=vmem, size = 0x12000, scoped, tag = 'internal scratch']
  #allocation2 [shape = 'f32[16,10]{1,0:T(8,128)}', space=vmem, size = 0x2000, scoped, tag = 'scratch operand']
  %s0 = inlined_call_operand.vmem [shape: f32[2,16,10], index: 0, kind: input, shape index: {}]
  %s1 = inlined_call_operand.vmem [shape: f32[16,48], index: 1, kind: input, shape index: {}]
  %s2 = inlined_call_operand.vmem [shape: f32[16,1], index: 2, kind: input, shape index: {}]
  %s3 = inlined_call_operand.vmem [shape: f32[16,16], index: 3, kind: input, shape index: {}]
  %s4 = inlined_call_operand.vmem [shape: f32[2,16,1], index: 4, kind: input, shape index: {}]
  %s5 = inlined_call_operand.vmem [shape: f32[2,16,1], index: 5, kind: input, shape index: {}]
  %s6 = inlined_call_operand.vmem [shape: f32[2,16,48], index: 6, kind: input, shape index: {}]
  %s7 = inlined_call_operand.vmem [shape: f32[2,16,1], index: 7, kind: input, shape index: {}]
  %s8 = inlined_call_operand.vmem [shape: f32[2,16,1], index: 8, kind: input, shape index: {}]
  %s9 = inlined_call_operand.vmem [shape: f32[2,16,1], index: 9, kind: input, shape index: {}]
  %s10 = inlined_call_operand.vmem [shape: f32[2,16,48], index: 10, kind: input, shape index: {}]
  %s11 = inlined_call_operand.vmem [shape: f32[2,16,1], index: 11, kind: input, shape index: {}]
  %s12 = inlined_call_operand.vmem [shape: f32[2,16,8], index: 12, kind: output, shape index: {}]
  %s13 = sld [smem:[#allocation0]]
  $region81: #{tpu_custom_call.1} parent=0
    _
  %s15 = ssub.s32 1, %s13
  %s16 = scalar_select 0, %s15, %s13
  loop: start=0, step=1, limit=4
  $region2: #{tpu_custom_call.1} parent=0 // loop_pre_header
    _
  $region3: #{tpu_custom_call.1} parent=0 // loop_header
    %s18 = sphi 0, %s22
    %p19 = scmp.ge.s32.totalorder %s18, 4
    %s28 = sphi 0, %s30
    %s31 = sphi 0, %s28
    %s32 = sphi 0, %s31
    %s48 = sphi 0, %s32
    %s52 = sphi 0, %s52
    %s54 = sphi 0, %s52
    %s55 = sphi 0, %s54
    %s69 = sphi 0, %s55
    %s73 = sphi 0, %s73
    %s75 = sphi 0, %s73
    %s76 = sphi 0, %s75
    %s90 = sphi 0, %s76
    %s94 = sphi 0, %s94
    %s96 = sphi 0, %s94
    %s97 = sphi 0, %s96
    %s111 = sphi 0, %s97
    %s115 = sphi 0, %s115
    %s117 = sphi 0, %s115
    %s118 = sphi 0, %s117
    %s132 = sphi 0, %s118
    %s136 = sphi 0, %s136
    %s138 = sphi 0, %s136
    %s139 = sphi 0, %s138
    %s153 = sphi 0, %s139
    %s157 = sphi 0, %s157
    %s159 = sphi 0, %s157
    %s160 = sphi 0, %s159
    %s174 = sphi 0, %s160
    %s178 = sphi 0, %s178
    %s180 = sphi 0, %s178
    %s181 = sphi 0, %s180
    %s195 = sphi 0, %s181
    %s199 = sphi 0, %s199
    %s201 = sphi 0, %s199
    %s202 = sphi 0, %s201
    %s216 = sphi 0, %s202
    %s220 = sphi 0, %s220
    %s222 = sphi 0, %s220
    %s223 = sphi 0, %s222
    %s237 = sphi 0, %s223
    %s241 = sphi 0, %s241
    %s243 = sphi 0, %s241
    %s244 = sphi 0, %s243
    %s258 = sphi 0, %s244
    %s262 = sphi 0, %s262
    %s264 = sphi 0, %s262
    %s265 = sphi 0, %s264
    %s279 = sphi 0, %s265
    %s285 = sphi 0, %s287
    %s288 = sphi 0, %s285
    %s289 = sphi 0, %s288
    %s305 = sphi 0, %s289
  $region4: #{tpu_custom_call.1} parent=0 // loop_header_branch
    %21 = sbr.rel (%p19) target = $region8
  $region5: #{tpu_custom_call.1} parent=0 // loop_body
    %s23 = ssub.s32 %s18, 1
    %s24 = ssub.s32 %s18, 2
    %s25 = sadd.s32 %s18, 1
    %s26 = ssub.s32 %s18, %s25
    %p27 = scmp.eq.s32.totalorder %s26, 0
    %s29 = sadd.s32 %s28, 1
    %s30 = scalar_select %p27, %s28, %s29
    %p33 = pneg %p27
    %p34 = scmp.eq.s32.totalorder %s18, 1
    %p35 = por %p33, %p34
    %p36 = scmp.ne.s32.totalorder %s28, %s31
    %p37 = scmp.eq.s32.totalorder %s18, 0
    %p38 = por %p36, %p37
    %p39 = scmp.ne.s32.totalorder %s28, %s31
    %p40 = scmp.eq.s32.totalorder %s23, 1
    %p41 = por %p39, %p40
    %p42 = scmp.ne.s32.totalorder %s31, %s32
    %p43 = scmp.eq.s32.totalorder %s23, 0
    %p44 = por %p42, %p43
    %p45 = scmp.ne.s32.totalorder %s31, %s32
    %p46 = scmp.eq.s32.totalorder %s24, 1
    %p47 = por %p45, %p46
    %p49 = scmp.ne.s32.totalorder %s32, %s48
    %p50 = scmp.eq.s32.totalorder %s24, 0
    %p51 = por %p49, %p50
    %s53 = sadd.s32 %s52, 1
    %p56 = scmp.eq.s32.totalorder %s18, 1
    %p57 = scmp.ne.s32.totalorder %s52, %s54
    %p58 = scmp.eq.s32.totalorder %s18, 0
    %p59 = por %p57, %p58
    %p60 = scmp.ne.s32.totalorder %s52, %s54
    %p61 = scmp.eq.s32.totalorder %s23, 1
    %p62 = por %p60, %p61
    %p63 = scmp.ne.s32.totalorder %s54, %s55
    %p64 = scmp.eq.s32.totalorder %s23, 0
    %p65 = por %p63, %p64
    %p66 = scmp.ne.s32.totalorder %s54, %s55
    %p67 = scmp.eq.s32.totalorder %s24, 1
    %p68 = por %p66, %p67
    %p70 = scmp.ne.s32.totalorder %s55, %s69
    %p71 = scmp.eq.s32.totalorder %s24, 0
    %p72 = por %p70, %p71
    %s74 = sadd.s32 %s73, 1
    %p77 = scmp.eq.s32.totalorder %s18, 1
    %p78 = scmp.ne.s32.totalorder %s73, %s75
    %p79 = scmp.eq.s32.totalorder %s18, 0
    %p80 = por %p78, %p79
    %p81 = scmp.ne.s32.totalorder %s73, %s75
    %p82 = scmp.eq.s32.totalorder %s23, 1
    %p83 = por %p81, %p82
    %p84 = scmp.ne.s32.totalorder %s75, %s76
    %p85 = scmp.eq.s32.totalorder %s23, 0
    %p86 = por %p84, %p85
    %p87 = scmp.ne.s32.totalorder %s75, %s76
    %p88 = scmp.eq.s32.totalorder %s24, 1
    %p89 = por %p87, %p88
    %p91 = scmp.ne.s32.totalorder %s76, %s90
    %p92 = scmp.eq.s32.totalorder %s24, 0
    %p93 = por %p91, %p92
    %s95 = sadd.s32 %s94, 1
    %p98 = scmp.eq.s32.totalorder %s18, 1
    %p99 = scmp.ne.s32.totalorder %s94, %s96
    %p100 = scmp.eq.s32.totalorder %s18, 0
    %p101 = por %p99, %p100
    %p102 = scmp.ne.s32.totalorder %s94, %s96
    %p103 = scmp.eq.s32.totalorder %s23, 1
    %p104 = por %p102, %p103
    %p105 = scmp.ne.s32.totalorder %s96, %s97
    %p106 = scmp.eq.s32.totalorder %s23, 0
    %p107 = por %p105, %p106
    %p108 = scmp.ne.s32.totalorder %s96, %s97
    %p109 = scmp.eq.s32.totalorder %s24, 1
    %p110 = por %p108, %p109
    %p112 = scmp.ne.s32.totalorder %s97, %s111
    %p113 = scmp.eq.s32.totalorder %s24, 0
    %p114 = por %p112, %p113
    %s116 = sadd.s32 %s115, 1
    %p119 = scmp.eq.s32.totalorder %s18, 1
    %p120 = scmp.ne.s32.totalorder %s115, %s117
    %p121 = scmp.eq.s32.totalorder %s18, 0
    %p122 = por %p120, %p121
    %p123 = scmp.ne.s32.totalorder %s115, %s117
    %p124 = scmp.eq.s32.totalorder %s23, 1
    %p125 = por %p123, %p124
    %p126 = scmp.ne.s32.totalorder %s117, %s118
    %p127 = scmp.eq.s32.totalorder %s23, 0
    %p128 = por %p126, %p127
    %p129 = scmp.ne.s32.totalorder %s117, %s118
    %p130 = scmp.eq.s32.totalorder %s24, 1
    %p131 = por %p129, %p130
    %p133 = scmp.ne.s32.totalorder %s118, %s132
    %p134 = scmp.eq.s32.totalorder %s24, 0
    %p135 = por %p133, %p134
    %s137 = sadd.s32 %s136, 1
    %p140 = scmp.eq.s32.totalorder %s18, 1
    %p141 = scmp.ne.s32.totalorder %s136, %s138
    %p142 = scmp.eq.s32.totalorder %s18, 0
    %p143 = por %p141, %p142
    %p144 = scmp.ne.s32.totalorder %s136, %s138
    %p145 = scmp.eq.s32.totalorder %s23, 1
    %p146 = por %p144, %p145
    %p147 = scmp.ne.s32.totalorder %s138, %s139
    %p148 = scmp.eq.s32.totalorder %s23, 0
    %p149 = por %p147, %p148
    %p150 = scmp.ne.s32.totalorder %s138, %s139
    %p151 = scmp.eq.s32.totalorder %s24, 1
    %p152 = por %p150, %p151
    %p154 = scmp.ne.s32.totalorder %s139, %s153
    %p155 = scmp.eq.s32.totalorder %s24, 0
    %p156 = por %p154, %p155
    %s158 = sadd.s32 %s157, 1
    %p161 = scmp.eq.s32.totalorder %s18, 1
    %p162 = scmp.ne.s32.totalorder %s157, %s159
    %p163 = scmp.eq.s32.totalorder %s18, 0
    %p164 = por %p162, %p163
    %p165 = scmp.ne.s32.totalorder %s157, %s159
    %p166 = scmp.eq.s32.totalorder %s23, 1
    %p167 = por %p165, %p166
    %p168 = scmp.ne.s32.totalorder %s159, %s160
    %p169 = scmp.eq.s32.totalorder %s23, 0
    %p170 = por %p168, %p169
    %p171 = scmp.ne.s32.totalorder %s159, %s160
    %p172 = scmp.eq.s32.totalorder %s24, 1
    %p173 = por %p171, %p172
    %p175 = scmp.ne.s32.totalorder %s160, %s174
    %p176 = scmp.eq.s32.totalorder %s24, 0
    %p177 = por %p175, %p176
    %s179 = sadd.s32 %s178, 1
    %p182 = scmp.eq.s32.totalorder %s18, 1
    %p183 = scmp.ne.s32.totalorder %s178, %s180
    %p184 = scmp.eq.s32.totalorder %s18, 0
    %p185 = por %p183, %p184
    %p186 = scmp.ne.s32.totalorder %s178, %s180
    %p187 = scmp.eq.s32.totalorder %s23, 1
    %p188 = por %p186, %p187
    %p189 = scmp.ne.s32.totalorder %s180, %s181
    %p190 = scmp.eq.s32.totalorder %s23, 0
    %p191 = por %p189, %p190
    %p192 = scmp.ne.s32.totalorder %s180, %s181
    %p193 = scmp.eq.s32.totalorder %s24, 1
    %p194 = por %p192, %p193
    %p196 = scmp.ne.s32.totalorder %s181, %s195
    %p197 = scmp.eq.s32.totalorder %s24, 0
    %p198 = por %p196, %p197
    %s200 = sadd.s32 %s199, 1
    %p203 = scmp.eq.s32.totalorder %s18, 1
    %p204 = scmp.ne.s32.totalorder %s199, %s201
    %p205 = scmp.eq.s32.totalorder %s18, 0
    %p206 = por %p204, %p205
    %p207 = scmp.ne.s32.totalorder %s199, %s201
    %p208 = scmp.eq.s32.totalorder %s23, 1
    %p209 = por %p207, %p208
    %p210 = scmp.ne.s32.totalorder %s201, %s202
    %p211 = scmp.eq.s32.totalorder %s23, 0
    %p212 = por %p210, %p211
    %p213 = scmp.ne.s32.totalorder %s201, %s202
    %p214 = scmp.eq.s32.totalorder %s24, 1
    %p215 = por %p213, %p214
    %p217 = scmp.ne.s32.totalorder %s202, %s216
    %p218 = scmp.eq.s32.totalorder %s24, 0
    %p219 = por %p217, %p218
    %s221 = sadd.s32 %s220, 1
    %p224 = scmp.eq.s32.totalorder %s18, 1
    %p225 = scmp.ne.s32.totalorder %s220, %s222
    %p226 = scmp.eq.s32.totalorder %s18, 0
    %p227 = por %p225, %p226
    %p228 = scmp.ne.s32.totalorder %s220, %s222
    %p229 = scmp.eq.s32.totalorder %s23, 1
    %p230 = por %p228, %p229
    %p231 = scmp.ne.s32.totalorder %s222, %s223
    %p232 = scmp.eq.s32.totalorder %s23, 0
    %p233 = por %p231, %p232
    %p234 = scmp.ne.s32.totalorder %s222, %s223
    %p235 = scmp.eq.s32.totalorder %s24, 1
    %p236 = por %p234, %p235
    %p238 = scmp.ne.s32.totalorder %s223, %s237
    %p239 = scmp.eq.s32.totalorder %s24, 0
    %p240 = por %p238, %p239
    %s242 = sadd.s32 %s241, 1
    %p245 = scmp.eq.s32.totalorder %s18, 1
    %p246 = scmp.ne.s32.totalorder %s241, %s243
    %p247 = scmp.eq.s32.totalorder %s18, 0
    %p248 = por %p246, %p247
    %p249 = scmp.ne.s32.totalorder %s241, %s243
    %p250 = scmp.eq.s32.totalorder %s23, 1
    %p251 = por %p249, %p250
    %p252 = scmp.ne.s32.totalorder %s243, %s244
    %p253 = scmp.eq.s32.totalorder %s23, 0
    %p254 = por %p252, %p253
    %p255 = scmp.ne.s32.totalorder %s243, %s244
    %p256 = scmp.eq.s32.totalorder %s24, 1
    %p257 = por %p255, %p256
    %p259 = scmp.ne.s32.totalorder %s244, %s258
    %p260 = scmp.eq.s32.totalorder %s24, 0
    %p261 = por %p259, %p260
    %s263 = sadd.s32 %s262, 1
    %p266 = scmp.eq.s32.totalorder %s18, 1
    %p267 = scmp.ne.s32.totalorder %s262, %s264
    %p268 = scmp.eq.s32.totalorder %s18, 0
    %p269 = por %p267, %p268
    %p270 = scmp.ne.s32.totalorder %s262, %s264
    %p271 = scmp.eq.s32.totalorder %s23, 1
    %p272 = por %p270, %p271
    %p273 = scmp.ne.s32.totalorder %s264, %s265
    %p274 = scmp.eq.s32.totalorder %s23, 0
    %p275 = por %p273, %p274
    %p276 = scmp.ne.s32.totalorder %s264, %s265
    %p277 = scmp.eq.s32.totalorder %s24, 1
    %p278 = por %p276, %p277
    %p280 = scmp.ne.s32.totalorder %s265, %s279
    %p281 = scmp.eq.s32.totalorder %s24, 0
    %p282 = por %p280, %p281
    %s283 = ssub.s32 %s18, %s25
    %p284 = scmp.eq.s32.totalorder %s283, 0
    %s286 = sadd.s32 %s285, 1
    %s287 = scalar_select %p284, %s285, %s286
    %p290 = pneg %p284
    %p291 = scmp.eq.s32.totalorder %s18, 1
    %p292 = por %p290, %p291
    %p293 = scmp.ne.s32.totalorder %s285, %s288
    %p294 = scmp.eq.s32.totalorder %s18, 0
    %p295 = por %p293, %p294
    %p296 = scmp.ne.s32.totalorder %s285, %s288
    %p297 = scmp.eq.s32.totalorder %s23, 1
    %p298 = por %p296, %p297
    %p299 = scmp.ne.s32.totalorder %s288, %s289
    %p300 = scmp.eq.s32.totalorder %s23, 0
    %p301 = por %p299, %p300
    %p302 = scmp.ne.s32.totalorder %s288, %s289
    %p303 = scmp.eq.s32.totalorder %s24, 1
    %p304 = por %p302, %p303
    %p306 = scmp.ne.s32.totalorder %s289, %s305
    %p307 = scmp.eq.s32.totalorder %s24, 0
    %p308 = por %p306, %p307
    %p309 = scmp.le.s32.totalorder 1, %s18
    %p310 = scmp.lt.s32.totalorder %s18, 3
    %p311 = pnand %p309, %p310
    %p312 = pneg %p311
    // Predicated region
    $region9: #{tpu_custom_call.1} parent=5 // pred_check
      _
    $region10: #{tpu_custom_call.1} parent=5 // pred_check_branch
      %314 = sbr.rel (%p311) target = $region12
    $region11: #{tpu_custom_call.1} parent=5 // pred_region
      %s315 = ssub.s32 %s18, 1
      // Predicated region
      $region13: #{tpu_custom_call.1} parent=11 // pred_check
        %p316 = pneg %p65
      $region14: #{tpu_custom_call.1} parent=11 // pred_check_branch
        %318 = sbr.rel (%p316) target = $region16
      $region15: #{tpu_custom_call.1} parent=11 // pred_region
        _
      $region16: #{tpu_custom_call.1} parent=11 // pred_fallthru
        _
      // Predicated region
      $region17: #{tpu_custom_call.1} parent=11 // pred_check
        %p319 = pneg %p86
      $region18: #{tpu_custom_call.1} parent=11 // pred_check_branch
        %321 = sbr.rel (%p319) target = $region20
      $region19: #{tpu_custom_call.1} parent=11 // pred_region
        _
      $region20: #{tpu_custom_call.1} parent=11 // pred_fallthru
        _
      // Predicated region
      $region21: #{tpu_custom_call.1} parent=11 // pred_check
        %p322 = pneg %p107
      $region22: #{tpu_custom_call.1} parent=11 // pred_check_branch
        %324 = sbr.rel (%p322) target = $region24
      $region23: #{tpu_custom_call.1} parent=11 // pred_region
        _
      $region24: #{tpu_custom_call.1} parent=11 // pred_fallthru
        _
      // Predicated region
      $region25: #{tpu_custom_call.1} parent=11 // pred_check
        %p325 = pneg %p128
      $region26: #{tpu_custom_call.1} parent=11 // pred_check_branch
        %327 = sbr.rel (%p325) target = $region28
      $region27: #{tpu_custom_call.1} parent=11 // pred_region
        _
      $region28: #{tpu_custom_call.1} parent=11 // pred_fallthru
        _
      // Predicated region
      $region29: #{tpu_custom_call.1} parent=11 // pred_check
        %p328 = pneg %p149
      $region30: #{tpu_custom_call.1} parent=11 // pred_check_branch
        %330 = sbr.rel (%p328) target = $region32
      $region31: #{tpu_custom_call.1} parent=11 // pred_region
        _
      $region32: #{tpu_custom_call.1} parent=11 // pred_fallthru
        _
      // Predicated region
      $region33: #{tpu_custom_call.1} parent=11 // pred_check
        %p331 = pneg %p170
      $region34: #{tpu_custom_call.1} parent=11 // pred_check_branch
        %333 = sbr.rel (%p331) target = $region36
      $region35: #{tpu_custom_call.1} parent=11 // pred_region
        _
      $region36: #{tpu_custom_call.1} parent=11 // pred_fallthru
        _
      // Predicated region
      $region37: #{tpu_custom_call.1} parent=11 // pred_check
        %p334 = pneg %p191
      $region38: #{tpu_custom_call.1} parent=11 // pred_check_branch
        %336 = sbr.rel (%p334) target = $region40
      $region39: #{tpu_custom_call.1} parent=11 // pred_region
        _
      $region40: #{tpu_custom_call.1} parent=11 // pred_fallthru
        _
      // Predicated region
      $region41: #{tpu_custom_call.1} parent=11 // pred_check
        %p337 = pneg %p212
      $region42: #{tpu_custom_call.1} parent=11 // pred_check_branch
        %339 = sbr.rel (%p337) target = $region44
      $region43: #{tpu_custom_call.1} parent=11 // pred_region
        _
      $region44: #{tpu_custom_call.1} parent=11 // pred_fallthru
        _
      // Predicated region
      $region45: #{tpu_custom_call.1} parent=11 // pred_check
        %p340 = pneg %p233
      $region46: #{tpu_custom_call.1} parent=11 // pred_check_branch
        %342 = sbr.rel (%p340) target = $region48
      $region47: #{tpu_custom_call.1} parent=11 // pred_region
        _
      $region48: #{tpu_custom_call.1} parent=11 // pred_fallthru
        _
      // Predicated region
      $region49: #{tpu_custom_call.1} parent=11 // pred_check
        %p343 = pneg %p254
      $region50: #{tpu_custom_call.1} parent=11 // pred_check_branch
        %345 = sbr.rel (%p343) target = $region52
      $region51: #{tpu_custom_call.1} parent=11 // pred_region
        _
      $region52: #{tpu_custom_call.1} parent=11 // pred_fallthru
        _
      // Predicated region
      $region53: #{tpu_custom_call.1} parent=11 // pred_check
        %p346 = pneg %p275
      $region54: #{tpu_custom_call.1} parent=11 // pred_check_branch
        %348 = sbr.rel (%p346) target = $region56
      $region55: #{tpu_custom_call.1} parent=11 // pred_region
        _
      $region56: #{tpu_custom_call.1} parent=11 // pred_fallthru
        _
    $region12: #{tpu_custom_call.1} parent=5 // pred_fallthru
      _
    %p349 = scmp.lt.s32.totalorder %s18, 2
    // Predicated region
    $region57: #{tpu_custom_call.1} parent=5 // pred_check
      %p350 = pneg %p349
    $region58: #{tpu_custom_call.1} parent=5 // pred_check_branch
      %352 = sbr.rel (%p350) target = $region60
    $region59: #{tpu_custom_call.1} parent=5 // pred_region
      // Predicated region
      $region61: #{tpu_custom_call.1} parent=59 // pred_check
        %p353 = pneg %p38
      $region62: #{tpu_custom_call.1} parent=59 // pred_check_branch
        %355 = sbr.rel (%p353) target = $region64
      $region63: #{tpu_custom_call.1} parent=59 // pred_region
        %p356 = scmp.lt.s32.totalorder %s18, 1
        %s357 = scalar_select %p356, %s18, 1
        %s358 = smul.addr %s357, 2
        %s359 = smul.addr %s358, 8
        %s360 = scalar_lea.vmem %s0, %s359
      $region64: #{tpu_custom_call.1} parent=59 // pred_fallthru
        _
    $region60: #{tpu_custom_call.1} parent=5 // pred_fallthru
      _
    %p361 = scmp.le.s32.totalorder 1, %s18
    %p362 = scmp.lt.s32.totalorder %s18, 3
    %p363 = pnand %p361, %p362
    %p364 = pneg %p363
    // Predicated region
    $region65: #{tpu_custom_call.1} parent=5 // pred_check
      _
    $region66: #{tpu_custom_call.1} parent=5 // pred_check_branch
      %366 = sbr.rel (%p363) target = $region68
    $region67: #{tpu_custom_call.1} parent=5 // pred_region
      %s367 = ssub.s32 %s18, 1
      %p368 = scmp.lt.s32.totalorder %s23, 1
      %s369 = scalar_select %p368, %s23, 1
      %s370 = smul.addr %s369, 2
      %s371 = smul.addr %s370, 8
      %s372 = scalar_lea.vmem %s0, %s371
      %p373 = pneg %p44
      %p374 = pneg %p41
      %p375 = pneg %p65
      %p376 = pneg %p62
      %p377 = pneg %p86
      %p378 = pneg %p83
      %p379 = pneg %p107
      %p380 = pneg %p104
      %p381 = pneg %p128
      %p382 = pneg %p125
      %p383 = pneg %p149
      %p384 = pneg %p146
      %p385 = pneg %p170
      %p386 = pneg %p167
      %p387 = pneg %p191
      %p388 = pneg %p188
      %p389 = pneg %p212
      %p390 = pneg %p209
      %p391 = pneg %p233
      %p392 = pneg %p230
      %p393 = pneg %p254
      %p394 = pneg %p251
      %p395 = pneg %p275
      %p396 = pneg %p272
      %p397 = pneg %p301
      %p398 = pneg %p298
      %p399 = scmp.lt.s32.totalorder %s23, 1
      %s400 = scalar_select %p399, %s23, 1
      %s401 = smul.addr %s400, 2
      %s402 = smul.addr %s401, 8
      %s403 = scalar_lea.vmem %s12, %s402
      %p404 = scmp.lt.s32.totalorder %s23, 1
      %s405 = scalar_select %p404, %s23, 1
      %s406 = smul.addr %s405, 2
      %s407 = smul.addr %s406, 8
      %s408 = scalar_lea.vmem %s0, %s407
      %p409 = scmp.lt.s32.totalorder %s23, 1
      %s410 = scalar_select %p409, %s23, 1
      %s411 = smul.addr %s410, 2
      %s412 = smul.addr %s411, 8
      %s413 = scalar_lea.vmem %s12, %s412
      %v414 = vld [vmem:[%s408] sm:$0xff]
      %v415 = vld [vmem:[%s408 + $0x8] sm:$0xff]
      %418 = vrot.lane.b32.xlu0 %v414, 127
      %v419 = vpop.permute.xlu0 %418
      %420 = vrot.lane.b32.xlu0 %v415, 127
      %v421 = vpop.permute.xlu0 %420
      %424 = vrot.lane.b32.xlu0 %v414, 126
      %v425 = vpop.permute.xlu0 %424
      %426 = vrot.lane.b32.xlu0 %v415, 126
      %v427 = vpop.permute.xlu0 %426
      %v430 = vld [vmem:[%s1] sm:$0xff]
      %v431 = vld [vmem:[%s1 + $0x8] sm:$0xff]
      %v432 = vld [vmem:[%s2] sm:$0xff]
      %v433 = vld [vmem:[%s2 + $0x8] sm:$0xff]
      %435 = vset.pattern.permute.xlu0 0
      %436 = vperm.xlu0 %435, %v432
      %v437 = vpop.permute.xlu0 %436
      %440 = vset.pattern.permute.xlu0 0
      %441 = vperm.xlu0 %440, %v433
      %v442 = vpop.permute.xlu0 %441
      %vm444 = vcmask 392192
      %v446 = vsel %vm444, %v430, 0
      %v449 = vsel %vm444, %v431, 0
      %451 = vmatprep.subr.mxu0 0.0
      %452 = vmatpush1.msra.mxu0 0.0
      %453 = vmatprep.subr.mxu0 0.0
      %454 = vmatpush1.msra.mxu0 0.0
      %455 = vmatprep.subr.mxu0 0.0
      %456 = vmatpush1.msra.mxu0 0.0
      %457 = vmatprep.subr.mxu0 0.0
      %458 = vmatpush1.msra.mxu0 0.0
      %459 = vmatprep.subr.mxu0 0.0
      %460 = vmatpush1.msra.mxu0 0.0
      %461 = vmatprep.subr.mxu0 0.0
      %462 = vmatpush1.msra.mxu0 0.0
      %463 = vmatprep.subr.mxu0 0.0
      %464 = vmatpush1.msra.mxu0 0.0
      %465 = vmatprep.subr.mxu0 0.0
      %466 = vmatpush1.msra.mxu0 0.0
      %467 = vmatprep.subr.mxu0 0.0
      %468 = vmatpush1.msra.mxu0 0.0
      %469 = vmatprep.subr.mxu0 0.0
      %470 = vmatpush1.msra.mxu0 0.0
      %471 = vmatprep.subr.mxu0 0.0
      %472 = vmatpush1.msra.mxu0 %v427
      %473 = vmatprep.subr.mxu0 0.0
      %474 = vmatpush1.msra.mxu0 %v425
      %475 = vmatprep.subr.mxu0 0.0
      %476 = vmatpush1.msra.mxu0 %v421
      %477 = vmatprep.subr.mxu0 0.0
      %478 = vmatpush1.msra.mxu0 %v419
      %479 = vmatprep.subr.mxu0 0.0
      %480 = vmatpush1.msra.mxu0 %v415
      %481 = vmatprep.subr.mxu0 0.0
      %482 = vmatpush1.msra.mxu0 %v414
      %483 = vmatprep.subr.mxu0 0.0
      %484 = vmatpush2.msra.mxu0 0.0
      %485 = vmatprep.subr.mxu0 0.0
      %486 = vmatpush2.msra.mxu0 0.0
      %487 = vmatprep.subr.mxu0 0.0
      %488 = vmatpush2.msra.mxu0 0.0
      %489 = vmatprep.subr.mxu0 0.0
      %490 = vmatpush2.msra.mxu0 0.0
      %491 = vmatprep.subr.mxu0 0.0
      %492 = vmatpush2.msra.mxu0 0.0
      %493 = vmatprep.subr.mxu0 0.0
      %494 = vmatpush2.msra.mxu0 0.0
      %495 = vmatprep.subr.mxu0 0.0
      %496 = vmatpush2.msra.mxu0 0.0
      %497 = vmatprep.subr.mxu0 0.0
      %498 = vmatpush2.msra.mxu0 0.0
      %499 = vmatprep.subr.mxu0 0.0
      %500 = vmatpush2.msra.mxu0 0.0
      %501 = vmatprep.subr.mxu0 0.0
      %502 = vmatpush2.msra.mxu0 0.0
      %503 = vmatprep.subr.mxu0 0.0
      %504 = vmatpush2.msra.mxu0 0.0
      %505 = vmatprep.subr.mxu0 0.0
      %506 = vmatpush2.msra.mxu0 0.0
      %507 = vmatprep.subr.mxu0 0.0
      %508 = vmatpush2.msra.mxu0 0.0
      %509 = vmatprep.subr.mxu0 0.0
      %510 = vmatpush2.msra.mxu0 0.0
      %511 = vmatprep.subr.mxu0 0.0
      %512 = vmatpush2.msra.mxu0 0.0
      %513 = vmatprep.subr.mxu0 0.0
      %514 = vmatpush2.msra.mxu0 0.0
      %515 = vmatprep.mubr.f32.mxu0 0.0
      %516 = vmatmul.mubr.f32.gmra.mxu0 %v446
      %v517 = vpop.f32.mrf.mxu0
      %v518 = vadd.f32 %v437, %v517
      %v519 = vpop.f32.mrf.mxu0
      %520 = vmatprep.mubr.f32.mxu0 0.0
      %521 = vmatmul.mubr.f32.gmra.mxu0 %v449
      %v522 = vpop.f32.mrf.mxu0
      %v523 = vadd.f32 %v442, %v522
      %v524 = vpop.f32.mrf.mxu0
      %525 = vdwg.mxu0
      %vm526 = vcmask 80896
      %527 = vst.msk [vmem:[#allocation2] sm:$0xff] %vm526, 0.0
      %528 = vst.msk [vmem:[#allocation2 + $0x8] sm:$0xff] %vm526, 0.0
      %v529 = vld [vmem:[%s3] sm:$0xff]
      %v530 = vld [vmem:[%s3 + $0x8] sm:$0xff]
      %v531 = vld [vmem:[%s4] sm:$0xff]
      %v532 = vld [vmem:[%s4 + $0x8] sm:$0xff]
      %v533 = vld [vmem:[%s5] sm:$0xff]
      %v534 = vld [vmem:[%s5 + $0x8] sm:$0xff]
      %v535 = vld [vmem:[%s6] sm:$0xff]
      %v536 = vld [vmem:[%s6 + $0x8] sm:$0xff]
      %v537 = vld [vmem:[%s7] sm:$0xff]
      %v538 = vld [vmem:[%s7 + $0x8] sm:$0xff]
      %vm539 = vcmask 64512
      %v540 = vsel %vm539, %v518, 0.0
      %541 = vadd.xlane.f32.xlu0 %v540
      %v542 = vpop.xlane.xlu0 %541
      %v543 = vsel %vm539, %v523, 0.0
      %544 = vadd.xlane.f32.xlu0 %v543
      %v545 = vpop.xlane.xlu0 %544
      %v546 = vmul.f32 %v518, %v518
      %v547 = vmul.f32 %v523, %v523
      %v548 = vsel %vm539, %v546, 0.0
      %549 = vadd.xlane.f32.xlu0 %v548
      %v550 = vpop.xlane.xlu0 %549
      %v551 = vsel %vm539, %v547, 0.0
      %552 = vadd.xlane.f32.xlu0 %v551
      %v553 = vpop.xlane.xlu0 %552
      %vm554 = vcmask 130048
      %v556 = vsel %vm554, %v529, 0
      %v559 = vsel %vm554, %v530, 0
      %561 = vmatprep.subr.mxu0 0.0
      %562 = vmatpush1.msra.mxu0 0.0
      %563 = vmatprep.subr.mxu0 0.0
      %564 = vmatpush1.msra.mxu0 0.0
      %565 = vmatprep.subr.mxu0 0.0
      %566 = vmatpush1.msra.mxu0 0.0
      %567 = vmatprep.subr.mxu0 0.0
      %568 = vmatpush1.msra.mxu0 0.0
      %569 = vmatprep.subr.mxu0 0.0
      %570 = vmatpush1.msra.mxu0 0.0
      %571 = vmatprep.subr.mxu0 0.0
      %572 = vmatpush1.msra.mxu0 0.0
      %573 = vmatprep.subr.mxu0 0.0
      %574 = vmatpush1.msra.mxu0 0.0
      %575 = vmatprep.subr.mxu0 0.0
      %576 = vmatpush1.msra.mxu0 0.0
      %577 = vmatprep.subr.mxu0 0.0
      %578 = vmatpush1.msra.mxu0 0.0
      %579 = vmatprep.subr.mxu0 0.0
      %580 = vmatpush1.msra.mxu0 0.0
      %581 = vmatprep.subr.mxu0 0.0
      %582 = vmatpush1.msra.mxu0 0.0
      %583 = vmatprep.subr.mxu0 0.0
      %584 = vmatpush1.msra.mxu0 0.0
      %585 = vmatprep.subr.mxu0 0.0
      %586 = vmatpush1.msra.mxu0 0.0
      %587 = vmatprep.subr.mxu0 0.0
      %588 = vmatpush1.msra.mxu0 0.0
      %589 = vmatprep.subr.mxu0 0.0
      %590 = vmatpush1.msra.mxu0 %v545
      %591 = vmatprep.subr.mxu0 0.0
      %592 = vmatpush1.msra.mxu0 %v542
      %593 = vmatprep.subr.mxu0 0.0
      %594 = vmatpush2.msra.mxu0 0.0
      %595 = vmatprep.subr.mxu0 0.0
      %596 = vmatpush2.msra.mxu0 0.0
      %597 = vmatprep.subr.mxu0 0.0
      %598 = vmatpush2.msra.mxu0 0.0
      %599 = vmatprep.subr.mxu0 0.0
      %600 = vmatpush2.msra.mxu0 0.0
      %601 = vmatprep.subr.mxu0 0.0
      %602 = vmatpush2.msra.mxu0 0.0
      %603 = vmatprep.subr.mxu0 0.0
      %604 = vmatpush2.msra.mxu0 0.0
      %605 = vmatprep.subr.mxu0 0.0
      %606 = vmatpush2.msra.mxu0 0.0
      %607 = vmatprep.subr.mxu0 0.0
      %608 = vmatpush2.msra.mxu0 0.0
      %609 = vmatprep.subr.mxu0 0.0
      %610 = vmatpush2.msra.mxu0 0.0
      %611 = vmatprep.subr.mxu0 0.0
      %612 = vmatpush2.msra.mxu0 0.0
      %613 = vmatprep.subr.mxu0 0.0
      %614 = vmatpush2.msra.mxu0 0.0
      %615 = vmatprep.subr.mxu0 0.0
      %616 = vmatpush2.msra.mxu0 0.0
      %617 = vmatprep.subr.mxu0 0.0
      %618 = vmatpush2.msra.mxu0 0.0
      %619 = vmatprep.subr.mxu0 0.0
      %620 = vmatpush2.msra.mxu0 0.0
      %621 = vmatprep.subr.mxu0 0.0
      %622 = vmatpush2.msra.mxu0 0.0
      %623 = vmatprep.subr.mxu0 0.0
      %624 = vmatpush2.msra.mxu0 0.0
      %625 = vmatprep.mubr.f32.mxu0 0.0
      %626 = vmatmul.mubr.f32.gmra.mxu0 %v556
      %v627 = vpop.f32.mrf.mxu0
      %v628 = vadd.f32 0.0, %v627
      %v629 = vpop.f32.mrf.mxu0
      %630 = vmatprep.mubr.f32.mxu0 0.0
      %631 = vmatmul.mubr.f32.gmra.mxu0 %v559
      %v632 = vpop.f32.mrf.mxu0
      %v633 = vadd.f32 0.0, %v632
      %v634 = vpop.f32.mrf.mxu0
      %635 = vdwg.mxu0
      %636 = vmatprep.subr.mxu0 0.0
      %637 = vmatpush1.msra.mxu0 0.0
      %638 = vmatprep.subr.mxu0 0.0
      %639 = vmatpush1.msra.mxu0 0.0
      %640 = vmatprep.subr.mxu0 0.0
      %641 = vmatpush1.msra.mxu0 0.0
      %642 = vmatprep.subr.mxu0 0.0
      %643 = vmatpush1.msra.mxu0 0.0
      %644 = vmatprep.subr.mxu0 0.0
      %645 = vmatpush1.msra.mxu0 0.0
      %646 = vmatprep.subr.mxu0 0.0
      %647 = vmatpush1.msra.mxu0 0.0
      %648 = vmatprep.subr.mxu0 0.0
      %649 = vmatpush1.msra.mxu0 0.0
      %650 = vmatprep.subr.mxu0 0.0
      %651 = vmatpush1.msra.mxu0 0.0
      %652 = vmatprep.subr.mxu0 0.0
      %653 = vmatpush1.msra.mxu0 0.0
      %654 = vmatprep.subr.mxu0 0.0
      %655 = vmatpush1.msra.mxu0 0.0
      %656 = vmatprep.subr.mxu0 0.0
      %657 = vmatpush1.msra.mxu0 0.0
      %658 = vmatprep.subr.mxu0 0.0
      %659 = vmatpush1.msra.mxu0 0.0
      %660 = vmatprep.subr.mxu0 0.0
      %661 = vmatpush1.msra.mxu0 0.0
      %662 = vmatprep.subr.mxu0 0.0
      %663 = vmatpush1.msra.mxu0 0.0
      %664 = vmatprep.subr.mxu0 0.0
      %665 = vmatpush1.msra.mxu0 %v553
      %666 = vmatprep.subr.mxu0 0.0
      %667 = vmatpush1.msra.mxu0 %v550
      %668 = vmatprep.subr.mxu0 0.0
      %669 = vmatpush2.msra.mxu0 0.0
      %670 = vmatprep.subr.mxu0 0.0
      %671 = vmatpush2.msra.mxu0 0.0
      %672 = vmatprep.subr.mxu0 0.0
      %673 = vmatpush2.msra.mxu0 0.0
      %674 = vmatprep.subr.mxu0 0.0
      %675 = vmatpush2.msra.mxu0 0.0
      %676 = vmatprep.subr.mxu0 0.0
      %677 = vmatpush2.msra.mxu0 0.0
      %678 = vmatprep.subr.mxu0 0.0
      %679 = vmatpush2.msra.mxu0 0.0
      %680 = vmatprep.subr.mxu0 0.0
      %681 = vmatpush2.msra.mxu0 0.0
      %682 = vmatprep.subr.mxu0 0.0
      %683 = vmatpush2.msra.mxu0 0.0
      %684 = vmatprep.subr.mxu0 0.0
      %685 = vmatpush2.msra.mxu0 0.0
      %686 = vmatprep.subr.mxu0 0.0
      %687 = vmatpush2.msra.mxu0 0.0
      %688 = vmatprep.subr.mxu0 0.0
      %689 = vmatpush2.msra.mxu0 0.0
      %690 = vmatprep.subr.mxu0 0.0
      %691 = vmatpush2.msra.mxu0 0.0
      %692 = vmatprep.subr.mxu0 0.0
      %693 = vmatpush2.msra.mxu0 0.0
      %694 = vmatprep.subr.mxu0 0.0
      %695 = vmatpush2.msra.mxu0 0.0
      %696 = vmatprep.subr.mxu0 0.0
      %697 = vmatpush2.msra.mxu0 0.0
      %698 = vmatprep.subr.mxu0 0.0
      %699 = vmatpush2.msra.mxu0 0.0
      %700 = vmatprep.mubr.f32.mxu0 0.0
      %701 = vmatmul.mubr.f32.gmra.mxu0 %v556
      %v702 = vpop.f32.mrf.mxu0
      %v703 = vadd.f32 0.0, %v702
      %v704 = vpop.f32.mrf.mxu0
      %705 = vmatprep.mubr.f32.mxu0 0.0
      %706 = vmatmul.mubr.f32.gmra.mxu0 %v559
      %v707 = vpop.f32.mrf.mxu0
      %v708 = vadd.f32 0.0, %v707
      %v709 = vpop.f32.mrf.mxu0
      %710 = vdwg.mxu0
      %v711 = vmul.f32 %v628, %v628
      %v712 = vmul.f32 %v633, %v633
      %v713 = vsub.f32 %v703, %v711
      %v714 = vsub.f32 %v708, %v712
      %v715 = vadd.f32 %v713, 1e-05
      %v716 = vadd.f32 %v714, 1e-05
      %v717 = vrsqrt.pop %v715
      %v718 = vrsqrt.pop %v716
      %v719 = vmul.f32 %v531, %v717
      %v720 = vmul.f32 %v532, %v718
      %v721 = vmul.f32 %v628, %v719
      %v722 = vmul.f32 %v633, %v720
      %v723 = vsub.f32 %v533, %v721
      %v724 = vsub.f32 %v534, %v722
      %726 = vset.pattern.permute.xlu0 0
      %727 = vperm.xlu0 %726, %v719
      %v728 = vpop.permute.xlu0 %727
      %731 = vset.pattern.permute.xlu0 0
      %732 = vperm.xlu0 %731, %v720
      %v733 = vpop.permute.xlu0 %732
      %v735 = vmul.f32 %v518, %v728
      %v736 = vmul.f32 %v523, %v733
      %738 = vset.pattern.permute.xlu0 0
      %739 = vperm.xlu0 %738, %v723
      %v740 = vpop.permute.xlu0 %739
      %743 = vset.pattern.permute.xlu0 0
      %744 = vperm.xlu0 %743, %v724
      %v745 = vpop.permute.xlu0 %744
      %v747 = vadd.f32 %v735, %v740
      %v748 = vadd.f32 %v736, %v745
      %v749 = vxor.u32 %v747, 2147483648
      %v750 = vxor.u32 %v748, 2147483648
      %v751 = vmul.f32 %v749, 1.442695
      %v752 = vpow.pop %v751
      %v753 = vmul.f32 %v750, 1.442695
      %v754 = vpow.pop %v753
      %v755 = vadd.f32 %v752, 1.0
      %v756 = vadd.f32 %v754, 1.0
      %v757 = vrcp.pop %v755
      %v758 = vmul.f32 1.0, %v757
      %v759 = vrcp.pop %v756
      %v760 = vmul.f32 1.0, %v759
      %v761 = vmul.f32 %v747, %v758
      %v762 = vmul.f32 %v748, %v760
      %765 = vrot.lane.b32.xlu0 %v761, 1
      %v766 = vpop.permute.xlu0 %765
      %767 = vrot.lane.b32.xlu0 %v762, 1
      %v768 = vpop.permute.xlu0 %767
      %vm771 = vcmask 72712
      %772 = vst.msk [vmem:[#allocation2] sm:$0xff] %vm771, %v766
      %773 = vst.msk [vmem:[#allocation2 + $0x8] sm:$0xff] %vm771, %v768
      %v774 = vld [vmem:[#allocation2] sm:$0xff]
      %v775 = vld [vmem:[#allocation2 + $0x8] sm:$0xff]
      %778 = vrot.lane.b32.xlu0 %v774, 126
      %v779 = vpop.permute.xlu0 %778
      %780 = vrot.lane.b32.xlu0 %v775, 126
      %v781 = vpop.permute.xlu0 %780
      %785 = vset.pattern.permute.xlu0 0
      %786 = vperm.xlu0 %785, %v537
      %v787 = vpop.permute.xlu0 %786
      %790 = vset.pattern.permute.xlu0 0
      %791 = vperm.xlu0 %790, %v538
      %v792 = vpop.permute.xlu0 %791
      %v795 = vsel %vm444, %v535, 0
      %v798 = vsel %vm444, %v536, 0
      %800 = vmatprep.subr.mxu0 0.0
      %801 = vmatpush1.msra.mxu0 0.0
      %802 = vmatprep.subr.mxu0 0.0
      %803 = vmatpush1.msra.mxu0 0.0
      %804 = vmatprep.subr.mxu0 0.0
      %805 = vmatpush1.msra.mxu0 0.0
      %806 = vmatprep.subr.mxu0 0.0
      %807 = vmatpush1.msra.mxu0 0.0
      %808 = vmatprep.subr.mxu0 0.0
      %809 = vmatpush1.msra.mxu0 0.0
      %810 = vmatprep.subr.mxu0 0.0
      %811 = vmatpush1.msra.mxu0 0.0
      %812 = vmatprep.subr.mxu0 0.0
      %813 = vmatpush1.msra.mxu0 0.0
      %814 = vmatprep.subr.mxu0 0.0
      %815 = vmatpush1.msra.mxu0 0.0
      %816 = vmatprep.subr.mxu0 0.0
      %817 = vmatpush1.msra.mxu0 0.0
      %818 = vmatprep.subr.mxu0 0.0
      %819 = vmatpush1.msra.mxu0 0.0
      %820 = vmatprep.subr.mxu0 0.0
      %821 = vmatpush1.msra.mxu0 %v781
      %822 = vmatprep.subr.mxu0 0.0
      %823 = vmatpush1.msra.mxu0 %v779
      %824 = vmatprep.subr.mxu0 0.0
      %825 = vmatpush1.msra.mxu0 %v762
      %826 = vmatprep.subr.mxu0 0.0
      %827 = vmatpush1.msra.mxu0 %v761
      %828 = vmatprep.subr.mxu0 0.0
      %829 = vmatpush1.msra.mxu0 %v775
      %830 = vmatprep.subr.mxu0 0.0
      %831 = vmatpush1.msra.mxu0 %v774
      %832 = vmatprep.subr.mxu0 0.0
      %833 = vmatpush2.msra.mxu0 0.0
      %834 = vmatprep.subr.mxu0 0.0
      %835 = vmatpush2.msra.mxu0 0.0
      %836 = vmatprep.subr.mxu0 0.0
      %837 = vmatpush2.msra.mxu0 0.0
      %838 = vmatprep.subr.mxu0 0.0
      %839 = vmatpush2.msra.mxu0 0.0
      %840 = vmatprep.subr.mxu0 0.0
      %841 = vmatpush2.msra.mxu0 0.0
      %842 = vmatprep.subr.mxu0 0.0
      %843 = vmatpush2.msra.mxu0 0.0
      %844 = vmatprep.subr.mxu0 0.0
      %845 = vmatpush2.msra.mxu0 0.0
      %846 = vmatprep.subr.mxu0 0.0
      %847 = vmatpush2.msra.mxu0 0.0
      %848 = vmatprep.subr.mxu0 0.0
      %849 = vmatpush2.msra.mxu0 0.0
      %850 = vmatprep.subr.mxu0 0.0
      %851 = vmatpush2.msra.mxu0 0.0
      %852 = vmatprep.subr.mxu0 0.0
      %853 = vmatpush2.msra.mxu0 0.0
      %854 = vmatprep.subr.mxu0 0.0
      %855 = vmatpush2.msra.mxu0 0.0
      %856 = vmatprep.subr.mxu0 0.0
      %857 = vmatpush2.msra.mxu0 0.0
      %858 = vmatprep.subr.mxu0 0.0
      %859 = vmatpush2.msra.mxu0 0.0
      %860 = vmatprep.subr.mxu0 0.0
      %861 = vmatpush2.msra.mxu0 0.0
      %862 = vmatprep.subr.mxu0 0.0
      %863 = vmatpush2.msra.mxu0 0.0
      %864 = vmatprep.mubr.f32.mxu0 0.0
      %865 = vmatmul.mubr.f32.gmra.mxu0 %v795
      %v866 = vpop.f32.mrf.mxu0
      %v867 = vadd.f32 %v787, %v866
      %v868 = vpop.f32.mrf.mxu0
      %869 = vmatprep.mubr.f32.mxu0 0.0
      %870 = vmatmul.mubr.f32.gmra.mxu0 %v798
      %v871 = vpop.f32.mrf.mxu0
      %v872 = vadd.f32 %v792, %v871
      %v873 = vpop.f32.mrf.mxu0
      %874 = vdwg.mxu0
      %v875 = vld [vmem:[%s8] sm:$0xff]
      %v876 = vld [vmem:[%s8 + $0x8] sm:$0xff]
      %v877 = vld [vmem:[%s9] sm:$0xff]
      %v878 = vld [vmem:[%s9 + $0x8] sm:$0xff]
      %v879 = vld [vmem:[%s10] sm:$0xff]
      %v880 = vld [vmem:[%s10 + $0x8] sm:$0xff]
      %v881 = vld [vmem:[%s11] sm:$0xff]
      %v882 = vld [vmem:[%s11 + $0x8] sm:$0xff]
      %v883 = vsel %vm539, %v867, 0.0
      %884 = vadd.xlane.f32.xlu0 %v883
      %v885 = vpop.xlane.xlu0 %884
      %v886 = vsel %vm539, %v872, 0.0
      %887 = vadd.xlane.f32.xlu0 %v886
      %v888 = vpop.xlane.xlu0 %887
      %v889 = vmul.f32 %v867, %v867
      %v890 = vmul.f32 %v872, %v872
      %v891 = vsel %vm539, %v889, 0.0
      %892 = vadd.xlane.f32.xlu0 %v891
      %v893 = vpop.xlane.xlu0 %892
      %v894 = vsel %vm539, %v890, 0.0
      %895 = vadd.xlane.f32.xlu0 %v894
      %v896 = vpop.xlane.xlu0 %895
      %897 = vmatprep.subr.mxu0 0.0
      %898 = vmatpush1.msra.mxu0 0.0
      %899 = vmatprep.subr.mxu0 0.0
      %900 = vmatpush1.msra.mxu0 0.0
      %901 = vmatprep.subr.mxu0 0.0
      %902 = vmatpush1.msra.mxu0 0.0
      %903 = vmatprep.subr.mxu0 0.0
      %904 = vmatpush1.msra.mxu0 0.0
      %905 = vmatprep.subr.mxu0 0.0
      %906 = vmatpush1.msra.mxu0 0.0
      %907 = vmatprep.subr.mxu0 0.0
      %908 = vmatpush1.msra.mxu0 0.0
      %909 = vmatprep.subr.mxu0 0.0
      %910 = vmatpush1.msra.mxu0 0.0
      %911 = vmatprep.subr.mxu0 0.0
      %912 = vmatpush1.msra.mxu0 0.0
      %913 = vmatprep.subr.mxu0 0.0
      %914 = vmatpush1.msra.mxu0 0.0
      %915 = vmatprep.subr.mxu0 0.0
      %916 = vmatpush1.msra.mxu0 0.0
      %917 = vmatprep.subr.mxu0 0.0
      %918 = vmatpush1.msra.mxu0 0.0
      %919 = vmatprep.subr.mxu0 0.0
      %920 = vmatpush1.msra.mxu0 0.0
      %921 = vmatprep.subr.mxu0 0.0
      %922 = vmatpush1.msra.mxu0 0.0
      %923 = vmatprep.subr.mxu0 0.0
      %924 = vmatpush1.msra.mxu0 0.0
      %925 = vmatprep.subr.mxu0 0.0
      %926 = vmatpush1.msra.mxu0 %v888
      %927 = vmatprep.subr.mxu0 0.0
      %928 = vmatpush1.msra.mxu0 %v885
      %929 = vmatprep.subr.mxu0 0.0
      %930 = vmatpush2.msra.mxu0 0.0
      %931 = vmatprep.subr.mxu0 0.0
      %932 = vmatpush2.msra.mxu0 0.0
      %933 = vmatprep.subr.mxu0 0.0
      %934 = vmatpush2.msra.mxu0 0.0
      %935 = vmatprep.subr.mxu0 0.0
      %936 = vmatpush2.msra.mxu0 0.0
      %937 = vmatprep.subr.mxu0 0.0
      %938 = vmatpush2.msra.mxu0 0.0
      %939 = vmatprep.subr.mxu0 0.0
      %940 = vmatpush2.msra.mxu0 0.0
      %941 = vmatprep.subr.mxu0 0.0
      %942 = vmatpush2.msra.mxu0 0.0
      %943 = vmatprep.subr.mxu0 0.0
      %944 = vmatpush2.msra.mxu0 0.0
      %945 = vmatprep.subr.mxu0 0.0
      %946 = vmatpush2.msra.mxu0 0.0
      %947 = vmatprep.subr.mxu0 0.0
      %948 = vmatpush2.msra.mxu0 0.0
      %949 = vmatprep.subr.mxu0 0.0
      %950 = vmatpush2.msra.mxu0 0.0
      %951 = vmatprep.subr.mxu0 0.0
      %952 = vmatpush2.msra.mxu0 0.0
      %953 = vmatprep.subr.mxu0 0.0
      %954 = vmatpush2.msra.mxu0 0.0
      %955 = vmatprep.subr.mxu0 0.0
      %956 = vmatpush2.msra.mxu0 0.0
      %957 = vmatprep.subr.mxu0 0.0
      %958 = vmatpush2.msra.mxu0 0.0
      %959 = vmatprep.subr.mxu0 0.0
      %960 = vmatpush2.msra.mxu0 0.0
      %961 = vmatprep.mubr.f32.mxu0 0.0
      %962 = vmatmul.mubr.f32.gmra.mxu0 %v556
      %v963 = vpop.f32.mrf.mxu0
      %v964 = vadd.f32 0.0, %v963
      %v965 = vpop.f32.mrf.mxu0
      %966 = vmatprep.mubr.f32.mxu0 0.0
      %967 = vmatmul.mubr.f32.gmra.mxu0 %v559
      %v968 = vpop.f32.mrf.mxu0
      %v969 = vadd.f32 0.0, %v968
      %v970 = vpop.f32.mrf.mxu0
      %971 = vdwg.mxu0
      %972 = vmatprep.subr.mxu0 0.0
      %973 = vmatpush1.msra.mxu0 0.0
      %974 = vmatprep.subr.mxu0 0.0
      %975 = vmatpush1.msra.mxu0 0.0
      %976 = vmatprep.subr.mxu0 0.0
      %977 = vmatpush1.msra.mxu0 0.0
      %978 = vmatprep.subr.mxu0 0.0
      %979 = vmatpush1.msra.mxu0 0.0
      %980 = vmatprep.subr.mxu0 0.0
      %981 = vmatpush1.msra.mxu0 0.0
      %982 = vmatprep.subr.mxu0 0.0
      %983 = vmatpush1.msra.mxu0 0.0
      %984 = vmatprep.subr.mxu0 0.0
      %985 = vmatpush1.msra.mxu0 0.0
      %986 = vmatprep.subr.mxu0 0.0
      %987 = vmatpush1.msra.mxu0 0.0
      %988 = vmatprep.subr.mxu0 0.0
      %989 = vmatpush1.msra.mxu0 0.0
      %990 = vmatprep.subr.mxu0 0.0
      %991 = vmatpush1.msra.mxu0 0.0
      %992 = vmatprep.subr.mxu0 0.0
      %993 = vmatpush1.msra.mxu0 0.0
      %994 = vmatprep.subr.mxu0 0.0
      %995 = vmatpush1.msra.mxu0 0.0
      %996 = vmatprep.subr.mxu0 0.0
      %997 = vmatpush1.msra.mxu0 0.0
      %998 = vmatprep.subr.mxu0 0.0
      %999 = vmatpush1.msra.mxu0 0.0
      %1000 = vmatprep.subr.mxu0 0.0
      %1001 = vmatpush1.msra.mxu0 %v896
      %1002 = vmatprep.subr.mxu0 0.0
      %1003 = vmatpush1.msra.mxu0 %v893
      %1004 = vmatprep.subr.mxu0 0.0
      %1005 = vmatpush2.msra.mxu0 0.0
      %1006 = vmatprep.subr.mxu0 0.0
      %1007 = vmatpush2.msra.mxu0 0.0
      %1008 = vmatprep.subr.mxu0 0.0
      %1009 = vmatpush2.msra.mxu0 0.0
      %1010 = vmatprep.subr.mxu0 0.0
      %1011 = vmatpush2.msra.mxu0 0.0
      %1012 = vmatprep.subr.mxu0 0.0
      %1013 = vmatpush2.msra.mxu0 0.0
      %1014 = vmatprep.subr.mxu0 0.0
      %1015 = vmatpush2.msra.mxu0 0.0
      %1016 = vmatprep.subr.mxu0 0.0
      %1017 = vmatpush2.msra.mxu0 0.0
      %1018 = vmatprep.subr.mxu0 0.0
      %1019 = vmatpush2.msra.mxu0 0.0
      %1020 = vmatprep.subr.mxu0 0.0
      %1021 = vmatpush2.msra.mxu0 0.0
      %1022 = vmatprep.subr.mxu0 0.0
      %1023 = vmatpush2.msra.mxu0 0.0
      %1024 = vmatprep.subr.mxu0 0.0
      %1025 = vmatpush2.msra.mxu0 0.0
      %1026 = vmatprep.subr.mxu0 0.0
      %1027 = vmatpush2.msra.mxu0 0.0
      %1028 = vmatprep.subr.mxu0 0.0
      %1029 = vmatpush2.msra.mxu0 0.0
      %1030 = vmatprep.subr.mxu0 0.0
      %1031 = vmatpush2.msra.mxu0 0.0
      %1032 = vmatprep.subr.mxu0 0.0
      %1033 = vmatpush2.msra.mxu0 0.0
      %1034 = vmatprep.subr.mxu0 0.0
      %1035 = vmatpush2.msra.mxu0 0.0
      %1036 = vmatprep.mubr.f32.mxu0 0.0
      %1037 = vmatmul.mubr.f32.gmra.mxu0 %v556
      %v1038 = vpop.f32.mrf.mxu0
      %v1039 = vadd.f32 0.0, %v1038
      %v1040 = vpop.f32.mrf.mxu0
      %1041 = vmatprep.mubr.f32.mxu0 0.0
      %1042 = vmatmul.mubr.f32.gmra.mxu0 %v559
      %v1043 = vpop.f32.mrf.mxu0
      %v1044 = vadd.f32 0.0, %v1043
      %v1045 = vpop.f32.mrf.mxu0
      %1046 = vdwg.mxu0
      %v1047 = vmul.f32 %v964, %v964
      %v1048 = vmul.f32 %v969, %v969
      %v1049 = vsub.f32 %v1039, %v1047
      %v1050 = vsub.f32 %v1044, %v1048
      %v1051 = vadd.f32 %v1049, 1e-05
      %v1052 = vadd.f32 %v1050, 1e-05
      %v1053 = vrsqrt.pop %v1051
      %v1054 = vrsqrt.pop %v1052
      %v1055 = vmul.f32 %v875, %v1053
      %v1056 = vmul.f32 %v876, %v1054
      %v1057 = vmul.f32 %v964, %v1055
      %v1058 = vmul.f32 %v969, %v1056
      %v1059 = vsub.f32 %v877, %v1057
      %v1060 = vsub.f32 %v878, %v1058
      %1062 = vset.pattern.permute.xlu0 0
      %1063 = vperm.xlu0 %1062, %v1055
      %v1064 = vpop.permute.xlu0 %1063
      %1067 = vset.pattern.permute.xlu0 0
      %1068 = vperm.xlu0 %1067, %v1056
      %v1069 = vpop.permute.xlu0 %1068
      %v1071 = vmul.f32 %v867, %v1064
      %v1072 = vmul.f32 %v872, %v1069
      %1074 = vset.pattern.permute.xlu0 0
      %1075 = vperm.xlu0 %1074, %v1059
      %v1076 = vpop.permute.xlu0 %1075
      %1079 = vset.pattern.permute.xlu0 0
      %1080 = vperm.xlu0 %1079, %v1060
      %v1081 = vpop.permute.xlu0 %1080
      %v1083 = vadd.f32 %v1071, %v1076
      %v1084 = vadd.f32 %v1072, %v1081
      %v1085 = vxor.u32 %v1083, 2147483648
      %v1086 = vxor.u32 %v1084, 2147483648
      %v1087 = vmul.f32 %v1085, 1.442695
      %v1088 = vpow.pop %v1087
      %v1089 = vmul.f32 %v1086, 1.442695
      %v1090 = vpow.pop %v1089
      %v1091 = vadd.f32 %v1088, 1.0
      %v1092 = vadd.f32 %v1090, 1.0
      %v1093 = vrcp.pop %v1091
      %v1094 = vmul.f32 1.0, %v1093
      %v1095 = vrcp.pop %v1092
      %v1096 = vmul.f32 1.0, %v1095
      %v1097 = vmul.f32 %v1083, %v1094
      %v1098 = vmul.f32 %v1084, %v1096
      %1101 = vrot.lane.b32.xlu0 %v1097, 1
      %v1102 = vpop.permute.xlu0 %1101
      %1103 = vrot.lane.b32.xlu0 %v1098, 1
      %v1104 = vpop.permute.xlu0 %1103
      %1107 = vst.msk [vmem:[#allocation2] sm:$0xff] %vm771, %v1102
      %1108 = vst.msk [vmem:[#allocation2 + $0x8] sm:$0xff] %vm771, %v1104
      %v1109 = vld [vmem:[#allocation2] sm:$0xff]
      %v1110 = vld [vmem:[#allocation2 + $0x8] sm:$0xff]
      %1113 = vrot.lane.b32.xlu0 %v1109, 126
      %v1114 = vpop.permute.xlu0 %1113
      %1115 = vrot.lane.b32.xlu0 %v1110, 126
      %v1116 = vpop.permute.xlu0 %1115
      %1120 = vset.pattern.permute.xlu0 0
      %1121 = vperm.xlu0 %1120, %v881
      %v1122 = vpop.permute.xlu0 %1121
      %1125 = vset.pattern.permute.xlu0 0
      %1126 = vperm.xlu0 %1125, %v882
      %v1127 = vpop.permute.xlu0 %1126
      %v1130 = vsel %vm444, %v879, 0
      %v1133 = vsel %vm444, %v880, 0
      %1135 = vmatprep.subr.mxu0 0.0
      %1136 = vmatpush1.msra.mxu0 0.0
      %1137 = vmatprep.subr.mxu0 0.0
      %1138 = vmatpush1.msra.mxu0 0.0
      %1139 = vmatprep.subr.mxu0 0.0
      %1140 = vmatpush1.msra.mxu0 0.0
      %1141 = vmatprep.subr.mxu0 0.0
      %1142 = vmatpush1.msra.mxu0 0.0
      %1143 = vmatprep.subr.mxu0 0.0
      %1144 = vmatpush1.msra.mxu0 0.0
      %1145 = vmatprep.subr.mxu0 0.0
      %1146 = vmatpush1.msra.mxu0 0.0
      %1147 = vmatprep.subr.mxu0 0.0
      %1148 = vmatpush1.msra.mxu0 0.0
      %1149 = vmatprep.subr.mxu0 0.0
      %1150 = vmatpush1.msra.mxu0 0.0
      %1151 = vmatprep.subr.mxu0 0.0
      %1152 = vmatpush1.msra.mxu0 0.0
      %1153 = vmatprep.subr.mxu0 0.0
      %1154 = vmatpush1.msra.mxu0 0.0
      %1155 = vmatprep.subr.mxu0 0.0
      %1156 = vmatpush1.msra.mxu0 %v1116
      %1157 = vmatprep.subr.mxu0 0.0
      %1158 = vmatpush1.msra.mxu0 %v1114
      %1159 = vmatprep.subr.mxu0 0.0
      %1160 = vmatpush1.msra.mxu0 %v1098
      %1161 = vmatprep.subr.mxu0 0.0
      %1162 = vmatpush1.msra.mxu0 %v1097
      %1163 = vmatprep.subr.mxu0 0.0
      %1164 = vmatpush1.msra.mxu0 %v1110
      %1165 = vmatprep.subr.mxu0 0.0
      %1166 = vmatpush1.msra.mxu0 %v1109
      %1167 = vmatprep.subr.mxu0 0.0
      %1168 = vmatpush2.msra.mxu0 0.0
      %1169 = vmatprep.subr.mxu0 0.0
      %1170 = vmatpush2.msra.mxu0 0.0
      %1171 = vmatprep.subr.mxu0 0.0
      %1172 = vmatpush2.msra.mxu0 0.0
      %1173 = vmatprep.subr.mxu0 0.0
      %1174 = vmatpush2.msra.mxu0 0.0
      %1175 = vmatprep.subr.mxu0 0.0
      %1176 = vmatpush2.msra.mxu0 0.0
      %1177 = vmatprep.subr.mxu0 0.0
      %1178 = vmatpush2.msra.mxu0 0.0
      %1179 = vmatprep.subr.mxu0 0.0
      %1180 = vmatpush2.msra.mxu0 0.0
      %1181 = vmatprep.subr.mxu0 0.0
      %1182 = vmatpush2.msra.mxu0 0.0
      %1183 = vmatprep.subr.mxu0 0.0
      %1184 = vmatpush2.msra.mxu0 0.0
      %1185 = vmatprep.subr.mxu0 0.0
      %1186 = vmatpush2.msra.mxu0 0.0
      %1187 = vmatprep.subr.mxu0 0.0
      %1188 = vmatpush2.msra.mxu0 0.0
      %1189 = vmatprep.subr.mxu0 0.0
      %1190 = vmatpush2.msra.mxu0 0.0
      %1191 = vmatprep.subr.mxu0 0.0
      %1192 = vmatpush2.msra.mxu0 0.0
      %1193 = vmatprep.subr.mxu0 0.0
      %1194 = vmatpush2.msra.mxu0 0.0
      %1195 = vmatprep.subr.mxu0 0.0
      %1196 = vmatpush2.msra.mxu0 0.0
      %1197 = vmatprep.subr.mxu0 0.0
      %1198 = vmatpush2.msra.mxu0 0.0
      %1199 = vmatprep.mubr.f32.mxu0 0.0
      %1200 = vmatmul.mubr.f32.gmra.mxu0 %v1130
      %v1201 = vpop.f32.mrf.mxu0
      %v1202 = vadd.f32 %v1122, %v1201
      %v1203 = vpop.f32.mrf.mxu0
      %1204 = vmatprep.mubr.f32.mxu0 0.0
      %1205 = vmatmul.mubr.f32.gmra.mxu0 %v1133
      %v1206 = vpop.f32.mrf.mxu0
      %v1207 = vadd.f32 %v1127, %v1206
      %v1208 = vpop.f32.mrf.mxu0
      %1209 = vdwg.mxu0
      %v1210 = vadd.f32 %v1202, %v518
      %v1211 = vadd.f32 %v1207, %v523
      %s1212 = scalar_lea.vmem %s4, 16
      %v1213 = vld [vmem:[%s1212] sm:$0xff]
      %v1214 = vld [vmem:[%s1212 + $0x8] sm:$0xff]
      %s1215 = scalar_lea.vmem %s5, 16
      %v1216 = vld [vmem:[%s1215] sm:$0xff]
      %v1217 = vld [vmem:[%s1215 + $0x8] sm:$0xff]
      %s1218 = scalar_lea.vmem %s6, 16
      %v1219 = vld [vmem:[%s1218] sm:$0xff]
      %v1220 = vld [vmem:[%s1218 + $0x8] sm:$0xff]
      %s1221 = scalar_lea.vmem %s7, 16
      %v1222 = vld [vmem:[%s1221] sm:$0xff]
      %v1223 = vld [vmem:[%s1221 + $0x8] sm:$0xff]
      %v1224 = vsel %vm539, %v1210, 0.0
      %1225 = vadd.xlane.f32.xlu0 %v1224
      %v1226 = vpop.xlane.xlu0 %1225
      %v1227 = vsel %vm539, %v1211, 0.0
      %1228 = vadd.xlane.f32.xlu0 %v1227
      %v1229 = vpop.xlane.xlu0 %1228
      %v1230 = vmul.f32 %v1210, %v1210
      %v1231 = vmul.f32 %v1211, %v1211
      %v1232 = vsel %vm539, %v1230, 0.0
      %1233 = vadd.xlane.f32.xlu0 %v1232
      %v1234 = vpop.xlane.xlu0 %1233
      %v1235 = vsel %vm539, %v1231, 0.0
      %1236 = vadd.xlane.f32.xlu0 %v1235
      %v1237 = vpop.xlane.xlu0 %1236
      %1238 = vmatprep.subr.mxu0 0.0
      %1239 = vmatpush1.msra.mxu0 0.0
      %1240 = vmatprep.subr.mxu0 0.0
      %1241 = vmatpush1.msra.mxu0 0.0
      %1242 = vmatprep.subr.mxu0 0.0
      %1243 = vmatpush1.msra.mxu0 0.0
      %1244 = vmatprep.subr.mxu0 0.0
      %1245 = vmatpush1.msra.mxu0 0.0
      %1246 = vmatprep.subr.mxu0 0.0
      %1247 = vmatpush1.msra.mxu0 0.0
      %1248 = vmatprep.subr.mxu0 0.0
      %1249 = vmatpush1.msra.mxu0 0.0
      %1250 = vmatprep.subr.mxu0 0.0
      %1251 = vmatpush1.msra.mxu0 0.0
      %1252 = vmatprep.subr.mxu0 0.0
      %1253 = vmatpush1.msra.mxu0 0.0
      %1254 = vmatprep.subr.mxu0 0.0
      %1255 = vmatpush1.msra.mxu0 0.0
      %1256 = vmatprep.subr.mxu0 0.0
      %1257 = vmatpush1.msra.mxu0 0.0
      %1258 = vmatprep.subr.mxu0 0.0
      %1259 = vmatpush1.msra.mxu0 0.0
      %1260 = vmatprep.subr.mxu0 0.0
      %1261 = vmatpush1.msra.mxu0 0.0
      %1262 = vmatprep.subr.mxu0 0.0
      %1263 = vmatpush1.msra.mxu0 0.0
      %1264 = vmatprep.subr.mxu0 0.0
      %1265 = vmatpush1.msra.mxu0 0.0
      %1266 = vmatprep.subr.mxu0 0.0
      %1267 = vmatpush1.msra.mxu0 %v1229
      %1268 = vmatprep.subr.mxu0 0.0
      %1269 = vmatpush1.msra.mxu0 %v1226
      %1270 = vmatprep.subr.mxu0 0.0
      %1271 = vmatpush2.msra.mxu0 0.0
      %1272 = vmatprep.subr.mxu0 0.0
      %1273 = vmatpush2.msra.mxu0 0.0
      %1274 = vmatprep.subr.mxu0 0.0
      %1275 = vmatpush2.msra.mxu0 0.0
      %1276 = vmatprep.subr.mxu0 0.0
      %1277 = vmatpush2.msra.mxu0 0.0
      %1278 = vmatprep.subr.mxu0 0.0
      %1279 = vmatpush2.msra.mxu0 0.0
      %1280 = vmatprep.subr.mxu0 0.0
      %1281 = vmatpush2.msra.mxu0 0.0
      %1282 = vmatprep.subr.mxu0 0.0
      %1283 = vmatpush2.msra.mxu0 0.0
      %1284 = vmatprep.subr.mxu0 0.0
      %1285 = vmatpush2.msra.mxu0 0.0
      %1286 = vmatprep.subr.mxu0 0.0
      %1287 = vmatpush2.msra.mxu0 0.0
      %1288 = vmatprep.subr.mxu0 0.0
      %1289 = vmatpush2.msra.mxu0 0.0
      %1290 = vmatprep.subr.mxu0 0.0
      %1291 = vmatpush2.msra.mxu0 0.0
      %1292 = vmatprep.subr.mxu0 0.0
      %1293 = vmatpush2.msra.mxu0 0.0
      %1294 = vmatprep.subr.mxu0 0.0
      %1295 = vmatpush2.msra.mxu0 0.0
      %1296 = vmatprep.subr.mxu0 0.0
      %1297 = vmatpush2.msra.mxu0 0.0
      %1298 = vmatprep.subr.mxu0 0.0
      %1299 = vmatpush2.msra.mxu0 0.0
      %1300 = vmatprep.subr.mxu0 0.0
      %1301 = vmatpush2.msra.mxu0 0.0
      %1302 = vmatprep.mubr.f32.mxu0 0.0
      %1303 = vmatmul.mubr.f32.gmra.mxu0 %v556
      %v1304 = vpop.f32.mrf.mxu0
      %v1305 = vadd.f32 0.0, %v1304
      %v1306 = vpop.f32.mrf.mxu0
      %1307 = vmatprep.mubr.f32.mxu0 0.0
      %1308 = vmatmul.mubr.f32.gmra.mxu0 %v559
      %v1309 = vpop.f32.mrf.mxu0
      %v1310 = vadd.f32 0.0, %v1309
      %v1311 = vpop.f32.mrf.mxu0
      %1312 = vdwg.mxu0
      %1313 = vmatprep.subr.mxu0 0.0
      %1314 = vmatpush1.msra.mxu0 0.0
      %1315 = vmatprep.subr.mxu0 0.0
      %1316 = vmatpush1.msra.mxu0 0.0
      %1317 = vmatprep.subr.mxu0 0.0
      %1318 = vmatpush1.msra.mxu0 0.0
      %1319 = vmatprep.subr.mxu0 0.0
      %1320 = vmatpush1.msra.mxu0 0.0
      %1321 = vmatprep.subr.mxu0 0.0
      %1322 = vmatpush1.msra.mxu0 0.0
      %1323 = vmatprep.subr.mxu0 0.0
      %1324 = vmatpush1.msra.mxu0 0.0
      %1325 = vmatprep.subr.mxu0 0.0
      %1326 = vmatpush1.msra.mxu0 0.0
      %1327 = vmatprep.subr.mxu0 0.0
      %1328 = vmatpush1.msra.mxu0 0.0
      %1329 = vmatprep.subr.mxu0 0.0
      %1330 = vmatpush1.msra.mxu0 0.0
      %1331 = vmatprep.subr.mxu0 0.0
      %1332 = vmatpush1.msra.mxu0 0.0
      %1333 = vmatprep.subr.mxu0 0.0
      %1334 = vmatpush1.msra.mxu0 0.0
      %1335 = vmatprep.subr.mxu0 0.0
      %1336 = vmatpush1.msra.mxu0 0.0
      %1337 = vmatprep.subr.mxu0 0.0
      %1338 = vmatpush1.msra.mxu0 0.0
      %1339 = vmatprep.subr.mxu0 0.0
      %1340 = vmatpush1.msra.mxu0 0.0
      %1341 = vmatprep.subr.mxu0 0.0
      %1342 = vmatpush1.msra.mxu0 %v1237
      %1343 = vmatprep.subr.mxu0 0.0
      %1344 = vmatpush1.msra.mxu0 %v1234
      %1345 = vmatprep.subr.mxu0 0.0
      %1346 = vmatpush2.msra.mxu0 0.0
      %1347 = vmatprep.subr.mxu0 0.0
      %1348 = vmatpush2.msra.mxu0 0.0
      %1349 = vmatprep.subr.mxu0 0.0
      %1350 = vmatpush2.msra.mxu0 0.0
      %1351 = vmatprep.subr.mxu0 0.0
      %1352 = vmatpush2.msra.mxu0 0.0
      %1353 = vmatprep.subr.mxu0 0.0
      %1354 = vmatpush2.msra.mxu0 0.0
      %1355 = vmatprep.subr.mxu0 0.0
      %1356 = vmatpush2.msra.mxu0 0.0
      %1357 = vmatprep.subr.mxu0 0.0
      %1358 = vmatpush2.msra.mxu0 0.0
      %1359 = vmatprep.subr.mxu0 0.0
      %1360 = vmatpush2.msra.mxu0 0.0
      %1361 = vmatprep.subr.mxu0 0.0
      %1362 = vmatpush2.msra.mxu0 0.0
      %1363 = vmatprep.subr.mxu0 0.0
      %1364 = vmatpush2.msra.mxu0 0.0
      %1365 = vmatprep.subr.mxu0 0.0
      %1366 = vmatpush2.msra.mxu0 0.0
      %1367 = vmatprep.subr.mxu0 0.0
      %1368 = vmatpush2.msra.mxu0 0.0
      %1369 = vmatprep.subr.mxu0 0.0
      %1370 = vmatpush2.msra.mxu0 0.0
      %1371 = vmatprep.subr.mxu0 0.0
      %1372 = vmatpush2.msra.mxu0 0.0
      %1373 = vmatprep.subr.mxu0 0.0
      %1374 = vmatpush2.msra.mxu0 0.0
      %1375 = vmatprep.subr.mxu0 0.0
      %1376 = vmatpush2.msra.mxu0 0.0
      %1377 = vmatprep.mubr.f32.mxu0 0.0
      %1378 = vmatmul.mubr.f32.gmra.mxu0 %v556
      %v1379 = vpop.f32.mrf.mxu0
      %v1380 = vadd.f32 0.0, %v1379
      %v1381 = vpop.f32.mrf.mxu0
      %1382 = vmatprep.mubr.f32.mxu0 0.0
      %1383 = vmatmul.mubr.f32.gmra.mxu0 %v559
      %v1384 = vpop.f32.mrf.mxu0
      %v1385 = vadd.f32 0.0, %v1384
      %v1386 = vpop.f32.mrf.mxu0
      %1387 = vdwg.mxu0
      %v1388 = vmul.f32 %v1305, %v1305
      %v1389 = vmul.f32 %v1310, %v1310
      %v1390 = vsub.f32 %v1380, %v1388
      %v1391 = vsub.f32 %v1385, %v1389
      %v1392 = vadd.f32 %v1390, 1e-05
      %v1393 = vadd.f32 %v1391, 1e-05
      %v1394 = vrsqrt.pop %v1392
      %v1395 = vrsqrt.pop %v1393
      %v1396 = vmul.f32 %v1213, %v1394
      %v1397 = vmul.f32 %v1214, %v1395
      %v1398 = vmul.f32 %v1305, %v1396
      %v1399 = vmul.f32 %v1310, %v1397
      %v1400 = vsub.f32 %v1216, %v1398
      %v1401 = vsub.f32 %v1217, %v1399
      %1403 = vset.pattern.permute.xlu0 0
      %1404 = vperm.xlu0 %1403, %v1396
      %v1405 = vpop.permute.xlu0 %1404
      %1408 = vset.pattern.permute.xlu0 0
      %1409 = vperm.xlu0 %1408, %v1397
      %v1410 = vpop.permute.xlu0 %1409
      %v1412 = vmul.f32 %v1210, %v1405
      %v1413 = vmul.f32 %v1211, %v1410
      %1415 = vset.pattern.permute.xlu0 0
      %1416 = vperm.xlu0 %1415, %v1400
      %v1417 = vpop.permute.xlu0 %1416
      %1420 = vset.pattern.permute.xlu0 0
      %1421 = vperm.xlu0 %1420, %v1401
      %v1422 = vpop.permute.xlu0 %1421
      %v1424 = vadd.f32 %v1412, %v1417
      %v1425 = vadd.f32 %v1413, %v1422
      %v1426 = vxor.u32 %v1424, 2147483648
      %v1427 = vxor.u32 %v1425, 2147483648
      %v1428 = vmul.f32 %v1426, 1.442695
      %v1429 = vpow.pop %v1428
      %v1430 = vmul.f32 %v1427, 1.442695
      %v1431 = vpow.pop %v1430
      %v1432 = vadd.f32 %v1429, 1.0
      %v1433 = vadd.f32 %v1431, 1.0
      %v1434 = vrcp.pop %v1432
      %v1435 = vmul.f32 1.0, %v1434
      %v1436 = vrcp.pop %v1433
      %v1437 = vmul.f32 1.0, %v1436
      %v1438 = vmul.f32 %v1424, %v1435
      %v1439 = vmul.f32 %v1425, %v1437
      %1442 = vrot.lane.b32.xlu0 %v1438, 1
      %v1443 = vpop.permute.xlu0 %1442
      %1444 = vrot.lane.b32.xlu0 %v1439, 1
      %v1445 = vpop.permute.xlu0 %1444
      %1448 = vst.msk [vmem:[#allocation2] sm:$0xff] %vm771, %v1443
      %1449 = vst.msk [vmem:[#allocation2 + $0x8] sm:$0xff] %vm771, %v1445
      %v1450 = vld [vmem:[#allocation2] sm:$0xff]
      %v1451 = vld [vmem:[#allocation2 + $0x8] sm:$0xff]
      %1454 = vrot.lane.b32.xlu0 %v1450, 126
      %v1455 = vpop.permute.xlu0 %1454
      %1456 = vrot.lane.b32.xlu0 %v1451, 126
      %v1457 = vpop.permute.xlu0 %1456
      %1461 = vset.pattern.permute.xlu0 0
      %1462 = vperm.xlu0 %1461, %v1222
      %v1463 = vpop.permute.xlu0 %1462
      %1466 = vset.pattern.permute.xlu0 0
      %1467 = vperm.xlu0 %1466, %v1223
      %v1468 = vpop.permute.xlu0 %1467
      %v1471 = vsel %vm444, %v1219, 0
      %v1474 = vsel %vm444, %v1220, 0
      %1476 = vmatprep.subr.mxu0 0.0
      %1477 = vmatpush1.msra.mxu0 0.0
      %1478 = vmatprep.subr.mxu0 0.0
      %1479 = vmatpush1.msra.mxu0 0.0
      %1480 = vmatprep.subr.mxu0 0.0
      %1481 = vmatpush1.msra.mxu0 0.0
      %1482 = vmatprep.subr.mxu0 0.0
      %1483 = vmatpush1.msra.mxu0 0.0
      %1484 = vmatprep.subr.mxu0 0.0
      %1485 = vmatpush1.msra.mxu0 0.0
      %1486 = vmatprep.subr.mxu0 0.0
      %1487 = vmatpush1.msra.mxu0 0.0
      %1488 = vmatprep.subr.mxu0 0.0
      %1489 = vmatpush1.msra.mxu0 0.0
      %1490 = vmatprep.subr.mxu0 0.0
      %1491 = vmatpush1.msra.mxu0 0.0
      %1492 = vmatprep.subr.mxu0 0.0
      %1493 = vmatpush1.msra.mxu0 0.0
      %1494 = vmatprep.subr.mxu0 0.0
      %1495 = vmatpush1.msra.mxu0 0.0
      %1496 = vmatprep.subr.mxu0 0.0
      %1497 = vmatpush1.msra.mxu0 %v1457
      %1498 = vmatprep.subr.mxu0 0.0
      %1499 = vmatpush1.msra.mxu0 %v1455
      %1500 = vmatprep.subr.mxu0 0.0
      %1501 = vmatpush1.msra.mxu0 %v1439
      %1502 = vmatprep.subr.mxu0 0.0
      %1503 = vmatpush1.msra.mxu0 %v1438
      %1504 = vmatprep.subr.mxu0 0.0
      %1505 = vmatpush1.msra.mxu0 %v1451
      %1506 = vmatprep.subr.mxu0 0.0
      %1507 = vmatpush1.msra.mxu0 %v1450
      %1508 = vmatprep.subr.mxu0 0.0
      %1509 = vmatpush2.msra.mxu0 0.0
      %1510 = vmatprep.subr.mxu0 0.0
      %1511 = vmatpush2.msra.mxu0 0.0
      %1512 = vmatprep.subr.mxu0 0.0
      %1513 = vmatpush2.msra.mxu0 0.0
      %1514 = vmatprep.subr.mxu0 0.0
      %1515 = vmatpush2.msra.mxu0 0.0
      %1516 = vmatprep.subr.mxu0 0.0
      %1517 = vmatpush2.msra.mxu0 0.0
      %1518 = vmatprep.subr.mxu0 0.0
      %1519 = vmatpush2.msra.mxu0 0.0
      %1520 = vmatprep.subr.mxu0 0.0
      %1521 = vmatpush2.msra.mxu0 0.0
      %1522 = vmatprep.subr.mxu0 0.0
      %1523 = vmatpush2.msra.mxu0 0.0
      %1524 = vmatprep.subr.mxu0 0.0
      %1525 = vmatpush2.msra.mxu0 0.0
      %1526 = vmatprep.subr.mxu0 0.0
      %1527 = vmatpush2.msra.mxu0 0.0
      %1528 = vmatprep.subr.mxu0 0.0
      %1529 = vmatpush2.msra.mxu0 0.0
      %1530 = vmatprep.subr.mxu0 0.0
      %1531 = vmatpush2.msra.mxu0 0.0
      %1532 = vmatprep.subr.mxu0 0.0
      %1533 = vmatpush2.msra.mxu0 0.0
      %1534 = vmatprep.subr.mxu0 0.0
      %1535 = vmatpush2.msra.mxu0 0.0
      %1536 = vmatprep.subr.mxu0 0.0
      %1537 = vmatpush2.msra.mxu0 0.0
      %1538 = vmatprep.subr.mxu0 0.0
      %1539 = vmatpush2.msra.mxu0 0.0
      %1540 = vmatprep.mubr.f32.mxu0 0.0
      %1541 = vmatmul.mubr.f32.gmra.mxu0 %v1471
      %v1542 = vpop.f32.mrf.mxu0
      %v1543 = vadd.f32 %v1463, %v1542
      %v1544 = vpop.f32.mrf.mxu0
      %1545 = vmatprep.mubr.f32.mxu0 0.0
      %1546 = vmatmul.mubr.f32.gmra.mxu0 %v1474
      %v1547 = vpop.f32.mrf.mxu0
      %v1548 = vadd.f32 %v1468, %v1547
      %v1549 = vpop.f32.mrf.mxu0
      %1550 = vdwg.mxu0
      %s1551 = scalar_lea.vmem %s8, 16
      %v1552 = vld [vmem:[%s1551] sm:$0xff]
      %v1553 = vld [vmem:[%s1551 + $0x8] sm:$0xff]
      %s1554 = scalar_lea.vmem %s9, 16
      %v1555 = vld [vmem:[%s1554] sm:$0xff]
      %v1556 = vld [vmem:[%s1554 + $0x8] sm:$0xff]
      %s1557 = scalar_lea.vmem %s10, 16
      %v1558 = vld [vmem:[%s1557] sm:$0xff]
      %v1559 = vld [vmem:[%s1557 + $0x8] sm:$0xff]
      %s1560 = scalar_lea.vmem %s11, 16
      %v1561 = vld [vmem:[%s1560] sm:$0xff]
      %v1562 = vld [vmem:[%s1560 + $0x8] sm:$0xff]
      %v1563 = vsel %vm539, %v1543, 0.0
      %1564 = vadd.xlane.f32.xlu0 %v1563
      %v1565 = vpop.xlane.xlu0 %1564
      %v1566 = vsel %vm539, %v1548, 0.0
      %1567 = vadd.xlane.f32.xlu0 %v1566
      %v1568 = vpop.xlane.xlu0 %1567
      %v1569 = vmul.f32 %v1543, %v1543
      %v1570 = vmul.f32 %v1548, %v1548
      %v1571 = vsel %vm539, %v1569, 0.0
      %1572 = vadd.xlane.f32.xlu0 %v1571
      %v1573 = vpop.xlane.xlu0 %1572
      %v1574 = vsel %vm539, %v1570, 0.0
      %1575 = vadd.xlane.f32.xlu0 %v1574
      %v1576 = vpop.xlane.xlu0 %1575
      %1577 = vmatprep.subr.mxu0 0.0
      %1578 = vmatpush1.msra.mxu0 0.0
      %1579 = vmatprep.subr.mxu0 0.0
      %1580 = vmatpush1.msra.mxu0 0.0
      %1581 = vmatprep.subr.mxu0 0.0
      %1582 = vmatpush1.msra.mxu0 0.0
      %1583 = vmatprep.subr.mxu0 0.0
      %1584 = vmatpush1.msra.mxu0 0.0
      %1585 = vmatprep.subr.mxu0 0.0
      %1586 = vmatpush1.msra.mxu0 0.0
      %1587 = vmatprep.subr.mxu0 0.0
      %1588 = vmatpush1.msra.mxu0 0.0
      %1589 = vmatprep.subr.mxu0 0.0
      %1590 = vmatpush1.msra.mxu0 0.0
      %1591 = vmatprep.subr.mxu0 0.0
      %1592 = vmatpush1.msra.mxu0 0.0
      %1593 = vmatprep.subr.mxu0 0.0
      %1594 = vmatpush1.msra.mxu0 0.0
      %1595 = vmatprep.subr.mxu0 0.0
      %1596 = vmatpush1.msra.mxu0 0.0
      %1597 = vmatprep.subr.mxu0 0.0
      %1598 = vmatpush1.msra.mxu0 0.0
      %1599 = vmatprep.subr.mxu0 0.0
      %1600 = vmatpush1.msra.mxu0 0.0
      %1601 = vmatprep.subr.mxu0 0.0
      %1602 = vmatpush1.msra.mxu0 0.0
      %1603 = vmatprep.subr.mxu0 0.0
      %1604 = vmatpush1.msra.mxu0 0.0
      %1605 = vmatprep.subr.mxu0 0.0
      %1606 = vmatpush1.msra.mxu0 %v1568
      %1607 = vmatprep.subr.mxu0 0.0
      %1608 = vmatpush1.msra.mxu0 %v1565
      %1609 = vmatprep.subr.mxu0 0.0
      %1610 = vmatpush2.msra.mxu0 0.0
      %1611 = vmatprep.subr.mxu0 0.0
      %1612 = vmatpush2.msra.mxu0 0.0
      %1613 = vmatprep.subr.mxu0 0.0
      %1614 = vmatpush2.msra.mxu0 0.0
      %1615 = vmatprep.subr.mxu0 0.0
      %1616 = vmatpush2.msra.mxu0 0.0
      %1617 = vmatprep.subr.mxu0 0.0
      %1618 = vmatpush2.msra.mxu0 0.0
      %1619 = vmatprep.subr.mxu0 0.0
      %1620 = vmatpush2.msra.mxu0 0.0
      %1621 = vmatprep.subr.mxu0 0.0
      %1622 = vmatpush2.msra.mxu0 0.0
      %1623 = vmatprep.subr.mxu0 0.0
      %1624 = vmatpush2.msra.mxu0 0.0
      %1625 = vmatprep.subr.mxu0 0.0
      %1626 = vmatpush2.msra.mxu0 0.0
      %1627 = vmatprep.subr.mxu0 0.0
      %1628 = vmatpush2.msra.mxu0 0.0
      %1629 = vmatprep.subr.mxu0 0.0
      %1630 = vmatpush2.msra.mxu0 0.0
      %1631 = vmatprep.subr.mxu0 0.0
      %1632 = vmatpush2.msra.mxu0 0.0
      %1633 = vmatprep.subr.mxu0 0.0
      %1634 = vmatpush2.msra.mxu0 0.0
      %1635 = vmatprep.subr.mxu0 0.0
      %1636 = vmatpush2.msra.mxu0 0.0
      %1637 = vmatprep.subr.mxu0 0.0
      %1638 = vmatpush2.msra.mxu0 0.0
      %1639 = vmatprep.subr.mxu0 0.0
      %1640 = vmatpush2.msra.mxu0 0.0
      %1641 = vmatprep.mubr.f32.mxu0 0.0
      %1642 = vmatmul.mubr.f32.gmra.mxu0 %v556
      %v1643 = vpop.f32.mrf.mxu0
      %v1644 = vadd.f32 0.0, %v1643
      %v1645 = vpop.f32.mrf.mxu0
      %1646 = vmatprep.mubr.f32.mxu0 0.0
      %1647 = vmatmul.mubr.f32.gmra.mxu0 %v559
      %v1648 = vpop.f32.mrf.mxu0
      %v1649 = vadd.f32 0.0, %v1648
      %v1650 = vpop.f32.mrf.mxu0
      %1651 = vdwg.mxu0
      %1652 = vmatprep.subr.mxu0 0.0
      %1653 = vmatpush1.msra.mxu0 0.0
      %1654 = vmatprep.subr.mxu0 0.0
      %1655 = vmatpush1.msra.mxu0 0.0
      %1656 = vmatprep.subr.mxu0 0.0
      %1657 = vmatpush1.msra.mxu0 0.0
      %1658 = vmatprep.subr.mxu0 0.0
      %1659 = vmatpush1.msra.mxu0 0.0
      %1660 = vmatprep.subr.mxu0 0.0
      %1661 = vmatpush1.msra.mxu0 0.0
      %1662 = vmatprep.subr.mxu0 0.0
      %1663 = vmatpush1.msra.mxu0 0.0
      %1664 = vmatprep.subr.mxu0 0.0
      %1665 = vmatpush1.msra.mxu0 0.0
      %1666 = vmatprep.subr.mxu0 0.0
      %1667 = vmatpush1.msra.mxu0 0.0
      %1668 = vmatprep.subr.mxu0 0.0
      %1669 = vmatpush1.msra.mxu0 0.0
      %1670 = vmatprep.subr.mxu0 0.0
      %1671 = vmatpush1.msra.mxu0 0.0
      %1672 = vmatprep.subr.mxu0 0.0
      %1673 = vmatpush1.msra.mxu0 0.0
      %1674 = vmatprep.subr.mxu0 0.0
      %1675 = vmatpush1.msra.mxu0 0.0
      %1676 = vmatprep.subr.mxu0 0.0
      %1677 = vmatpush1.msra.mxu0 0.0
      %1678 = vmatprep.subr.mxu0 0.0
      %1679 = vmatpush1.msra.mxu0 0.0
      %1680 = vmatprep.subr.mxu0 0.0
      %1681 = vmatpush1.msra.mxu0 %v1576
      %1682 = vmatprep.subr.mxu0 0.0
      %1683 = vmatpush1.msra.mxu0 %v1573
      %1684 = vmatprep.subr.mxu0 0.0
      %1685 = vmatpush2.msra.mxu0 0.0
      %1686 = vmatprep.subr.mxu0 0.0
      %1687 = vmatpush2.msra.mxu0 0.0
      %1688 = vmatprep.subr.mxu0 0.0
      %1689 = vmatpush2.msra.mxu0 0.0
      %1690 = vmatprep.subr.mxu0 0.0
      %1691 = vmatpush2.msra.mxu0 0.0
      %1692 = vmatprep.subr.mxu0 0.0
      %1693 = vmatpush2.msra.mxu0 0.0
      %1694 = vmatprep.subr.mxu0 0.0
      %1695 = vmatpush2.msra.mxu0 0.0
      %1696 = vmatprep.subr.mxu0 0.0
      %1697 = vmatpush2.msra.mxu0 0.0
      %1698 = vmatprep.subr.mxu0 0.0
      %1699 = vmatpush2.msra.mxu0 0.0
      %1700 = vmatprep.subr.mxu0 0.0
      %1701 = vmatpush2.msra.mxu0 0.0
      %1702 = vmatprep.subr.mxu0 0.0
      %1703 = vmatpush2.msra.mxu0 0.0
      %1704 = vmatprep.subr.mxu0 0.0
      %1705 = vmatpush2.msra.mxu0 0.0
      %1706 = vmatprep.subr.mxu0 0.0
      %1707 = vmatpush2.msra.mxu0 0.0
      %1708 = vmatprep.subr.mxu0 0.0
      %1709 = vmatpush2.msra.mxu0 0.0
      %1710 = vmatprep.subr.mxu0 0.0
      %1711 = vmatpush2.msra.mxu0 0.0
      %1712 = vmatprep.subr.mxu0 0.0
      %1713 = vmatpush2.msra.mxu0 0.0
      %1714 = vmatprep.subr.mxu0 0.0
      %1715 = vmatpush2.msra.mxu0 0.0
      %1716 = vmatprep.mubr.f32.mxu0 0.0
      %1717 = vmatmul.mubr.f32.gmra.mxu0 %v556
      %v1718 = vpop.f32.mrf.mxu0
      %v1719 = vadd.f32 0.0, %v1718
      %v1720 = vpop.f32.mrf.mxu0
      %1721 = vmatprep.mubr.f32.mxu0 0.0
      %1722 = vmatmul.mubr.f32.gmra.mxu0 %v559
      %v1723 = vpop.f32.mrf.mxu0
      %v1724 = vadd.f32 0.0, %v1723
      %v1725 = vpop.f32.mrf.mxu0
      %1726 = vdwg.mxu0
      %v1727 = vmul.f32 %v1644, %v1644
      %v1728 = vmul.f32 %v1649, %v1649
      %v1729 = vsub.f32 %v1719, %v1727
      %v1730 = vsub.f32 %v1724, %v1728
      %v1731 = vadd.f32 %v1729, 1e-05
      %v1732 = vadd.f32 %v1730, 1e-05
      %v1733 = vrsqrt.pop %v1731
      %v1734 = vrsqrt.pop %v1732
      %v1735 = vmul.f32 %v1552, %v1733
      %v1736 = vmul.f32 %v1553, %v1734
      %v1737 = vmul.f32 %v1644, %v1735
      %v1738 = vmul.f32 %v1649, %v1736
      %v1739 = vsub.f32 %v1555, %v1737
      %v1740 = vsub.f32 %v1556, %v1738
      %1742 = vset.pattern.permute.xlu0 0
      %1743 = vperm.xlu0 %1742, %v1735
      %v1744 = vpop.permute.xlu0 %1743
      %1747 = vset.pattern.permute.xlu0 0
      %1748 = vperm.xlu0 %1747, %v1736
      %v1749 = vpop.permute.xlu0 %1748
      %v1751 = vmul.f32 %v1543, %v1744
      %v1752 = vmul.f32 %v1548, %v1749
      %1754 = vset.pattern.permute.xlu0 0
      %1755 = vperm.xlu0 %1754, %v1739
      %v1756 = vpop.permute.xlu0 %1755
      %1759 = vset.pattern.permute.xlu0 0
      %1760 = vperm.xlu0 %1759, %v1740
      %v1761 = vpop.permute.xlu0 %1760
      %v1763 = vadd.f32 %v1751, %v1756
      %v1764 = vadd.f32 %v1752, %v1761
      %v1765 = vxor.u32 %v1763, 2147483648
      %v1766 = vxor.u32 %v1764, 2147483648
      %v1767 = vmul.f32 %v1765, 1.442695
      %v1768 = vpow.pop %v1767
      %v1769 = vmul.f32 %v1766, 1.442695
      %v1770 = vpow.pop %v1769
      %v1771 = vadd.f32 %v1768, 1.0
      %v1772 = vadd.f32 %v1770, 1.0
      %v1773 = vrcp.pop %v1771
      %v1774 = vmul.f32 1.0, %v1773
      %v1775 = vrcp.pop %v1772
      %v1776 = vmul.f32 1.0, %v1775
      %v1777 = vmul.f32 %v1763, %v1774
      %v1778 = vmul.f32 %v1764, %v1776
      %1781 = vrot.lane.b32.xlu0 %v1777, 1
      %v1782 = vpop.permute.xlu0 %1781
      %1783 = vrot.lane.b32.xlu0 %v1778, 1
      %v1784 = vpop.permute.xlu0 %1783
      %1787 = vst.msk [vmem:[#allocation2] sm:$0xff] %vm771, %v1782
      %1788 = vst.msk [vmem:[#allocation2 + $0x8] sm:$0xff] %vm771, %v1784
      %v1789 = vld [vmem:[#allocation2] sm:$0xff]
      %v1790 = vld [vmem:[#allocation2 + $0x8] sm:$0xff]
      %1793 = vrot.lane.b32.xlu0 %v1789, 126
      %v1794 = vpop.permute.xlu0 %1793
      %1795 = vrot.lane.b32.xlu0 %v1790, 126
      %v1796 = vpop.permute.xlu0 %1795
      %1800 = vset.pattern.permute.xlu0 0
      %1801 = vperm.xlu0 %1800, %v1561
      %v1802 = vpop.permute.xlu0 %1801
      %1805 = vset.pattern.permute.xlu0 0
      %1806 = vperm.xlu0 %1805, %v1562
      %v1807 = vpop.permute.xlu0 %1806
      %v1810 = vsel %vm444, %v1558, 0
      %v1813 = vsel %vm444, %v1559, 0
      %1815 = vmatprep.subr.mxu0 0.0
      %1816 = vmatpush1.msra.mxu0 0.0
      %1817 = vmatprep.subr.mxu0 0.0
      %1818 = vmatpush1.msra.mxu0 0.0
      %1819 = vmatprep.subr.mxu0 0.0
      %1820 = vmatpush1.msra.mxu0 0.0
      %1821 = vmatprep.subr.mxu0 0.0
      %1822 = vmatpush1.msra.mxu0 0.0
      %1823 = vmatprep.subr.mxu0 0.0
      %1824 = vmatpush1.msra.mxu0 0.0
      %1825 = vmatprep.subr.mxu0 0.0
      %1826 = vmatpush1.msra.mxu0 0.0
      %1827 = vmatprep.subr.mxu0 0.0
      %1828 = vmatpush1.msra.mxu0 0.0
      %1829 = vmatprep.subr.mxu0 0.0
      %1830 = vmatpush1.msra.mxu0 0.0
      %1831 = vmatprep.subr.mxu0 0.0
      %1832 = vmatpush1.msra.mxu0 0.0
      %1833 = vmatprep.subr.mxu0 0.0
      %1834 = vmatpush1.msra.mxu0 0.0
      %1835 = vmatprep.subr.mxu0 0.0
      %1836 = vmatpush1.msra.mxu0 %v1796
      %1837 = vmatprep.subr.mxu0 0.0
      %1838 = vmatpush1.msra.mxu0 %v1794
      %1839 = vmatprep.subr.mxu0 0.0
      %1840 = vmatpush1.msra.mxu0 %v1778
      %1841 = vmatprep.subr.mxu0 0.0
      %1842 = vmatpush1.msra.mxu0 %v1777
      %1843 = vmatprep.subr.mxu0 0.0
      %1844 = vmatpush1.msra.mxu0 %v1790
      %1845 = vmatprep.subr.mxu0 0.0
      %1846 = vmatpush1.msra.mxu0 %v1789
      %1847 = vmatprep.subr.mxu0 0.0
      %1848 = vmatpush2.msra.mxu0 0.0
      %1849 = vmatprep.subr.mxu0 0.0
      %1850 = vmatpush2.msra.mxu0 0.0
      %1851 = vmatprep.subr.mxu0 0.0
      %1852 = vmatpush2.msra.mxu0 0.0
      %1853 = vmatprep.subr.mxu0 0.0
      %1854 = vmatpush2.msra.mxu0 0.0
      %1855 = vmatprep.subr.mxu0 0.0
      %1856 = vmatpush2.msra.mxu0 0.0
      %1857 = vmatprep.subr.mxu0 0.0
      %1858 = vmatpush2.msra.mxu0 0.0
      %1859 = vmatprep.subr.mxu0 0.0
      %1860 = vmatpush2.msra.mxu0 0.0
      %1861 = vmatprep.subr.mxu0 0.0
      %1862 = vmatpush2.msra.mxu0 0.0
      %1863 = vmatprep.subr.mxu0 0.0
      %1864 = vmatpush2.msra.mxu0 0.0
      %1865 = vmatprep.subr.mxu0 0.0
      %1866 = vmatpush2.msra.mxu0 0.0
      %1867 = vmatprep.subr.mxu0 0.0
      %1868 = vmatpush2.msra.mxu0 0.0
      %1869 = vmatprep.subr.mxu0 0.0
      %1870 = vmatpush2.msra.mxu0 0.0
      %1871 = vmatprep.subr.mxu0 0.0
      %1872 = vmatpush2.msra.mxu0 0.0
      %1873 = vmatprep.subr.mxu0 0.0
      %1874 = vmatpush2.msra.mxu0 0.0
      %1875 = vmatprep.subr.mxu0 0.0
      %1876 = vmatpush2.msra.mxu0 0.0
      %1877 = vmatprep.subr.mxu0 0.0
      %1878 = vmatpush2.msra.mxu0 0.0
      %1879 = vmatprep.mubr.f32.mxu0 0.0
      %1880 = vmatmul.mubr.f32.gmra.mxu0 %v1810
      %v1881 = vpop.f32.mrf.mxu0
      %v1882 = vadd.f32 %v1802, %v1881
      %v1883 = vpop.f32.mrf.mxu0
      %1884 = vmatprep.mubr.f32.mxu0 0.0
      %1885 = vmatmul.mubr.f32.gmra.mxu0 %v1813
      %v1886 = vpop.f32.mrf.mxu0
      %v1887 = vadd.f32 %v1807, %v1886
      %v1888 = vpop.f32.mrf.mxu0
      %1889 = vdwg.mxu0
      %v1890 = vadd.f32 %v1882, %v1210
      %v1891 = vadd.f32 %v1887, %v1211
      %1892 = vst.msk [vmem:[%s413] sm:$0xff] %vm539, %v1890
      %1893 = vst.msk [vmem:[%s413 + $0x8] sm:$0xff] %vm539, %v1891
      %p1894 = scmp.lt.s32.totalorder %s23, 1
      %s1895 = scalar_select %p1894, %s23, 1
      %s1896 = smul.addr %s1895, 2
      %s1897 = smul.addr %s1896, 8
      %s1898 = scalar_lea.vmem %s12, %s1897
      // Predicated region
      $region69: #{tpu_custom_call.1} parent=67 // pred_check
        %p1899 = pneg %p298
      $region70: #{tpu_custom_call.1} parent=67 // pred_check_branch
        %1901 = sbr.rel (%p1899) target = $region72
      $region71: #{tpu_custom_call.1} parent=67 // pred_region
        _
      $region72: #{tpu_custom_call.1} parent=67 // pred_fallthru
        _
    $region68: #{tpu_custom_call.1} parent=5 // pred_fallthru
      _
    %p1902 = scmp.le.s32.totalorder 2, %s18
    // Predicated region
    $region73: #{tpu_custom_call.1} parent=5 // pred_check
      %p1903 = pneg %p1902
    $region74: #{tpu_custom_call.1} parent=5 // pred_check_branch
      %1905 = sbr.rel (%p1903) target = $region76
    $region75: #{tpu_custom_call.1} parent=5 // pred_region
      %s1906 = ssub.s32 %s18, 2
      // Predicated region
      $region77: #{tpu_custom_call.1} parent=75 // pred_check
        %p1907 = pneg %p304
      $region78: #{tpu_custom_call.1} parent=75 // pred_check_branch
        %1909 = sbr.rel (%p1907) target = $region80
      $region79: #{tpu_custom_call.1} parent=75 // pred_region
        %p1910 = scmp.lt.s32.totalorder %s24, 1
        %s1911 = scalar_select %p1910, %s24, 1
        %s1912 = smul.addr %s1911, 2
        %s1913 = smul.addr %s1912, 8
        %s1914 = scalar_lea.vmem %s12, %s1913
      $region80: #{tpu_custom_call.1} parent=75 // pred_fallthru
        _
    $region76: #{tpu_custom_call.1} parent=5 // pred_fallthru
      _
  $region6: #{tpu_custom_call.1} parent=0 // loop_footer
    %s22 = sadd.s32 1, %s18
  $region7: #{tpu_custom_call.1} parent=0 // loop_footer_branch
    %17 = sbr.rel target = $region3
  $region8: #{tpu_custom_call.1} parent=0 // loop_exit
    _

</llo_original>
